<compile_context>
chip_gen: v7x
topology: tpu7x:2x2x1
jax: 0.10.0
libtpu: 0.0.40
codegen_flags: <defaults>
</compile_context>

<pallas_src>
import jax
import jax.numpy as jnp
from jax import lax
from jax.experimental import pallas as pl
from jax.experimental.pallas import tpu as pltpu


def _round_up(x, m):
    return (x + m - 1) // m * m


def lstm_chunk_kernel(seqlen_ref, xw_ref, whh_ref, wd_ref, bd_ref, o_ref,
                      h_sc, c_sc, endh_sc):
    """One (batch-tile, time-chunk) grid step of the LSTM recurrence + head.

    seqlen_ref : (TN, 1)        int32  valid timesteps per row
    xw_ref     : (TC, TN, 4*HP) f32    precomputed x_t @ W_ih^T + (b_ih + b_hh)
    whh_ref    : (HP, 4*HP)     f32    recurrent weight (transposed, gate-padded)
    wd_ref     : (HP, 1)        f32    output-weight difference (class1 - class0)
    bd_ref     : (1, 1)         f32    output-bias difference
    o_ref      : (TN, 2)        f32    class probabilities
    h_sc/c_sc/endh_sc : (TN, HP) f32   state carried across time chunks
    """
    tc = pl.program_id(1)
    n_tc = pl.num_programs(1)
    TC, TN, _ = xw_ref.shape
    HP = whh_ref.shape[0]

    @pl.when(tc == 0)
    def _init():
        h_sc[...] = jnp.zeros_like(h_sc)
        c_sc[...] = jnp.zeros_like(c_sc)
        endh_sc[...] = jnp.zeros_like(endh_sc)

    whh = whh_ref[...]
    last_t = seqlen_ref[...] - 1          # (TN, 1); -1 for all-padding rows
    t0 = tc * TC

    def step(s, carry):
        h, c, end_h = carry
        # Only the serial dependency stays in the loop: h @ W_hh^T (MXU) plus a
        # read of the precomputed, lane-dense input projection.
        gates = xw_ref[s] + jnp.dot(h, whh, preferred_element_type=jnp.float32)
        i_g = jax.nn.sigmoid(gates[:, 0 * HP:1 * HP])
        f_g = jax.nn.sigmoid(gates[:, 1 * HP:2 * HP])
        g_g = jnp.tanh(gates[:, 2 * HP:3 * HP])
        o_g = jax.nn.sigmoid(gates[:, 3 * HP:4 * HP])
        c_new = f_g * c + i_g * g_g
        h_new = o_g * jnp.tanh(c_new)
        end_h = jnp.where(last_t == t0 + s, h_new, end_h)
        return h_new, c_new, end_h

    unroll = True if TC <= 16 else 8
    h, c, end_h = lax.fori_loop(
        0, TC, step, (h_sc[...], c_sc[...], endh_sc[...]), unroll=unroll)
    h_sc[...] = h
    c_sc[...] = c
    endh_sc[...] = end_h

    @pl.when(tc == n_tc - 1)
    def _finalize():
        # Linear(H, 2) + 2-class softmax == sigmoid of the logit difference.
        logit = jnp.dot(end_h, wd_ref[...],
                        preferred_element_type=jnp.float32) + bd_ref[...]  # (TN,1)
        p1 = jax.nn.sigmoid(logit)
        lane = lax.broadcasted_iota(jnp.int32, (TN, 2), 1)
        o_ref[...] = jnp.where(lane == 1, p1, 1.0 - p1)


@jax.jit
def rnn_binary_classifier_forward(x_NTF, w_ih, w_hh, b_ih, b_hh, w_out, b_out):
    """x_NTF: (N, T, F) float32 with trailing zero padding (pad_val = 0).
    Weights in PyTorch shapes: w_ih (4H, F), w_hh (4H, H), b_ih (4H,),
    b_hh (4H,), w_out (2, H), b_out (2,).  Returns yproba (N, 2)."""
    x = jnp.asarray(x_NTF, jnp.float32)
    N, T, F = x.shape
    H = w_hh.shape[1]
    HP = _round_up(H, 128)               # lane-align each gate slice
    TN = min(128, _round_up(N, 8))       # batch tile (sublane-aligned)
    NP = _round_up(N, TN)
    TC = T if T <= 32 else 32            # time chunk (bounds the VMEM block)
    TP = _round_up(T, TC)

    w_ih = jnp.asarray(w_ih, jnp.float32)
    w_hh = jnp.asarray(w_hh, jnp.float32)
    b = jnp.asarray(b_ih, jnp.float32) + jnp.asarray(b_hh, jnp.float32)
    w_out = jnp.asarray(w_out, jnp.float32)
    b_out = jnp.asarray(b_out, jnp.float32)

    def pad_gate_rows(w):                # (4H, K) -> (4HP, K), per-gate zero pad
        w4 = w.reshape(4, H, -1)
        w4 = jnp.pad(w4, ((0, 0), (0, HP - H), (0, 0)))
        return w4.reshape(4 * HP, -1)

    wih_p = pad_gate_rows(w_ih)                                    # (4HP, F)
    whh_p = jnp.pad(pad_gate_rows(w_hh), ((0, 0), (0, HP - H)))    # (4HP, HP)
    b_p = pad_gate_rows(b.reshape(4 * H, 1)).reshape(4 * HP)       # (4HP,)

    # seq_lens: count of non-all-zero timesteps (module's trailing-padding
    # convention when seq_lens_N is None).  Computed here so the kernel never
    # touches x.
    seq_lens = jnp.sum(jnp.any(x != 0.0, axis=-1), axis=-1).astype(jnp.int32)
    seq_lens_p = jnp.zeros((NP, 1), jnp.int32).at[:N, 0].set(seq_lens)

    # Hoisted input projection: one large GEMM, stored lane-dense (TP, NP, 4HP).
    # Padded timesteps / rows see xW == bias; they never update end_h.
    x_p = jnp.zeros((NP, TP, F), jnp.float32).at[:N, :T].set(x)
    xw = jnp.einsum('ntf,gf->tng', x_p, wih_p) + b_p[None, None, :]

    # Output head folded to a single logit difference.
    wd = jnp.zeros((HP, 1), jnp.float32).at[:H, 0].set(w_out[1] - w_out[0])
    bd = (b_out[1] - b_out[0]).reshape(1, 1)

    grid = (NP // TN, TP // TC)
    fn = pl.pallas_call(
        lstm_chunk_kernel,
        out_shape=jax.ShapeDtypeStruct((NP, 2), jnp.float32),
        grid_spec=pltpu.PrefetchScalarGridSpec(
            num_scalar_prefetch=0,
            grid=grid,
            in_specs=[
                pl.BlockSpec((TN, 1), lambda i, tc: (i, 0)),               # seq_lens
                pl.BlockSpec((TC, TN, 4 * HP), lambda i, tc: (tc, i, 0)),  # xW chunk
                pl.BlockSpec((HP, 4 * HP), lambda i, tc: (0, 0)),          # W_hh^T
                pl.BlockSpec((HP, 1), lambda i, tc: (0, 0)),               # w_out diff
                pl.BlockSpec((1, 1), lambda i, tc: (0, 0)),                # b_out diff
            ],
            out_specs=pl.BlockSpec((TN, 2), lambda i, tc: (i, 0)),
            scratch_shapes=[
                pltpu.VMEM((TN, HP), jnp.float32),   # h
                pltpu.VMEM((TN, HP), jnp.float32),   # c
                pltpu.VMEM((TN, HP), jnp.float32),   # end_h
            ],
        ),
        compiler_params=pltpu.CompilerParams(
            dimension_semantics=("parallel", "arbitrary"),
            vmem_limit_bytes=64 * 1024 * 1024,
        ),
    )
    probs = fn(seq_lens_p, xw, whh_p.T, wd, bd)
    return probs[:N]


def _reference_forward(x, w_ih, w_hh, b_ih, b_hh, w_out, b_out):
    """Pure-JAX reference mirroring the PyTorch forward (convert_to_log_reg=False)."""
    N, T, F = x.shape
    H = w_hh.shape[1]
    seq_lens = jnp.sum(~jnp.all(x == 0.0, axis=-1), axis=-1)       # (N,)
    h = jnp.zeros((N, H), jnp.float32)
    c = jnp.zeros((N, H), jnp.float32)
    end_h = jnp.zeros((N, H), jnp.float32)
    for t in range(T):
        gates = x[:, t, :] @ w_ih.T + h @ w_hh.T + b_ih + b_hh
        i_g = jax.nn.sigmoid(gates[:, 0 * H:1 * H])
        f_g = jax.nn.sigmoid(gates[:, 1 * H:2 * H])
        g_g = jnp.tanh(gates[:, 2 * H:3 * H])
        o_g = jax.nn.sigmoid(gates[:, 3 * H:4 * H])
        c = f_g * c + i_g * g_g
        h = o_g * jnp.tanh(c)
        end_h = jnp.where((seq_lens - 1 == t)[:, None], h, end_h)
    logits = end_h @ w_out.T + b_out
    return jax.nn.softmax(logits, axis=-1)


def _make_case(key, N, T, F, H):
    k_x, k1, k2, k3, k4, k5, k6, k_len = jax.random.split(key, 8)
    bound = 1.0 / jnp.sqrt(jnp.float32(H))   # PyTorch uniform(-1/sqrt(H), 1/sqrt(H))
    w_ih = jax.random.uniform(k1, (4 * H, F), jnp.float32, -bound, bound)
    w_hh = jax.random.uniform(k2, (4 * H, H), jnp.float32, -bound, bound)
    b_ih = jax.random.uniform(k3, (4 * H,), jnp.float32, -bound, bound)
    b_hh = jax.random.uniform(k4, (4 * H,), jnp.float32, -bound, bound)
    w_out = jax.random.uniform(k5, (2, H), jnp.float32, -bound, bound)
    b_out = jax.random.uniform(k6, (2,), jnp.float32, -bound, bound)
    x = jax.random.normal(k_x, (N, T, F), jnp.float32)
    seq_lens = jax.random.randint(k_len, (N,), max(1, T // 2), T + 1)
    seq_lens = seq_lens.at[0].set(T)         # at least one full-length sequence
    t_idx = jnp.arange(T)[None, :, None]     # trailing zero padding (pad_val = 0)
    x = jnp.where(t_idx < seq_lens[:, None, None], x, 0.0)
    return x, (w_ih, w_hh, b_ih, b_hh, w_out, b_out)


if __name__ == "__main__":
    key = jax.random.PRNGKey(0)
    k_a, k_b = jax.random.split(key)

    # Case 1: small shapes implied by the module (batch=2, seq=8, feat=4, hidden=32).
    x, params = _make_case(k_a, N=2, T=8, F=4, H=32)
    yproba = jax.block_until_ready(rnn_binary_classifier_forward(x, *params))
    ref = _reference_forward(x, *params)
    assert yproba.shape == (2, 2)
    assert jnp.allclose(jnp.sum(yproba, axis=-1), 1.0, atol=1e-5)
    assert jnp.allclose(yproba, ref, atol=1e-5, rtol=1e-5)

    # Case 2: longer sequence to exercise the time-chunked grid (2 chunks) and
    # the VMEM-scratch state carry.
    x2, params2 = _make_case(k_b, N=3, T=40, F=4, H=32)
    yproba2 = jax.block_until_ready(rnn_binary_classifier_forward(x2, *params2))
    ref2 = _reference_forward(x2, *params2)
    assert yproba2.shape == (3, 2)
    assert jnp.allclose(jnp.sum(yproba2, axis=-1), 1.0, atol=1e-5)
    assert jnp.allclose(yproba2, ref2, atol=1e-4, rtol=1e-4)

    print("KERNEL_OK")
</pallas_src>

<mosaic_0001>
module attributes {stable_mosaic.version = 11 : i64} {
  func.func @lstm_chunk_kernel(%arg0: i32, %arg1: i32, %arg2: memref<8x1xi32, #tpu.memory_space<vmem>>, %arg3: memref<8x8x512xf32, #tpu.memory_space<vmem>>, %arg4: memref<128x512xf32, #tpu.memory_space<vmem>>, %arg5: memref<128x1xf32, #tpu.memory_space<vmem>>, %arg6: memref<1x1xf32, #tpu.memory_space<vmem>>, %arg7: memref<8x2xf32, #tpu.memory_space<vmem>>, %arg8: memref<8x128xf32, #tpu.memory_space<vmem>>, %arg9: memref<8x128xf32, #tpu.memory_space<vmem>>, %arg10: memref<8x128xf32, #tpu.memory_space<vmem>>) attributes {dimension_semantics = [#tpu.dimension_semantics<parallel>, #tpu.dimension_semantics<arbitrary>], iteration_bounds = array<i64: 1, 1>, scalar_prefetch = 0 : i64, scratch_operands = 3 : i64, tpu.core_type = #tpu.core_type<tc>, window_params = [{transform_indices = @transform_0, window_bounds = array<i64: 8, 1>}, {transform_indices = @transform_1, window_bounds = array<i64: 8, 8, 512>}, {pipeline_mode = #tpu.pipeline_mode<synchronous>, transform_indices = @transform_2, window_bounds = array<i64: 128, 512>}, {pipeline_mode = #tpu.pipeline_mode<synchronous>, transform_indices = @transform_3, window_bounds = array<i64: 128, 1>}, {pipeline_mode = #tpu.pipeline_mode<synchronous>, transform_indices = @transform_4, window_bounds = array<i64: 1, 1>}, {transform_indices = @transform_5, window_bounds = array<i64: 8, 2>}]} {
    %c0_i32 = arith.constant 0 : i32
    %0 = arith.cmpi eq, %arg1, %c0_i32 : i32
    %1 = arith.extui %0 : i1 to i32
    %c0_i32_0 = arith.constant 0 : i32
    %2 = arith.cmpi ne, %1, %c0_i32_0 : i32
    scf.if %2 {
      %cst_68 = arith.constant 0.000000e+00 : f32
      %305 = vector.broadcast %cst_68 : f32 to vector<8x128xf32>
      %c0_69 = arith.constant 0 : index
      %c0_70 = arith.constant 0 : index
      %306 = vector.load %arg8[%c0_69, %c0_70] : memref<8x128xf32, #tpu.memory_space<vmem>>, vector<8x128xf32>
      tpu.vector_store %arg8[%c0_69, %c0_70], %305 {strides = array<i32>} : memref<8x128xf32, #tpu.memory_space<vmem>>, vector<8x128xf32>,
      %cst_71 = arith.constant 0.000000e+00 : f32
      %307 = vector.broadcast %cst_71 : f32 to vector<8x128xf32>
      %c0_72 = arith.constant 0 : index
      %c0_73 = arith.constant 0 : index
      %308 = vector.load %arg9[%c0_72, %c0_73] : memref<8x128xf32, #tpu.memory_space<vmem>>, vector<8x128xf32>
      tpu.vector_store %arg9[%c0_72, %c0_73], %307 {strides = array<i32>} : memref<8x128xf32, #tpu.memory_space<vmem>>, vector<8x128xf32>,
      %cst_74 = arith.constant 0.000000e+00 : f32
      %309 = vector.broadcast %cst_74 : f32 to vector<8x128xf32>
      %c0_75 = arith.constant 0 : index
      %c0_76 = arith.constant 0 : index
      %310 = vector.load %arg10[%c0_75, %c0_76] : memref<8x128xf32, #tpu.memory_space<vmem>>, vector<8x128xf32>
      tpu.vector_store %arg10[%c0_75, %c0_76], %309 {strides = array<i32>} : memref<8x128xf32, #tpu.memory_space<vmem>>, vector<8x128xf32>,
    } else {
    }
    %c0 = arith.constant 0 : index
    %c0_1 = arith.constant 0 : index
    %3 = vector.load %arg4[%c0, %c0_1] : memref<128x512xf32, #tpu.memory_space<vmem>>, vector<128x512xf32>
    %c0_2 = arith.constant 0 : index
    %c0_3 = arith.constant 0 : index
    %4 = vector.load %arg2[%c0_2, %c0_3] : memref<8x1xi32, #tpu.memory_space<vmem>>, vector<8x1xi32>
    %c1_i32 = arith.constant 1 : i32
    %5 = vector.broadcast %c1_i32 : i32 to vector<8x1xi32>
    %6 = arith.subi %4, %5 : vector<8x1xi32>
    %c8_i32 = arith.constant 8 : i32
    %7 = arith.muli %arg1, %c8_i32 : i32
    %c0_4 = arith.constant 0 : index
    %c0_5 = arith.constant 0 : index
    %8 = vector.load %arg8[%c0_4, %c0_5] : memref<8x128xf32, #tpu.memory_space<vmem>>, vector<8x128xf32>
    %c0_6 = arith.constant 0 : index
    %c0_7 = arith.constant 0 : index
    %9 = vector.load %arg9[%c0_6, %c0_7] : memref<8x128xf32, #tpu.memory_space<vmem>>, vector<8x128xf32>
    %c0_8 = arith.constant 0 : index
    %c0_9 = arith.constant 0 : index
    %10 = vector.load %arg10[%c0_8, %c0_9] : memref<8x128xf32, #tpu.memory_space<vmem>>, vector<8x128xf32>
    %c0_i32_10 = arith.constant 0 : i32
    %11 = arith.index_cast %c0_i32_10 : i32 to index
    %c0_11 = arith.constant 0 : index
    %c0_12 = arith.constant 0 : index
    %12 = vector.load %arg3[%11, %c0_11, %c0_12] : memref<8x8x512xf32, #tpu.memory_space<vmem>>, vector<1x8x512xf32>
    %13 = vector.shape_cast %12 : vector<1x8x512xf32> to vector<8x512xf32>
    %cst = arith.constant dense<0.000000e+00> : vector<8x512xf32>
    %14 = tpu.matmul %8, %3, %cst {dimension_numbers = #tpu.dot_dimension_numbers<[1], [0], [0], [1], [0, 0, 1, 1], [], []>} : vector<8x128xf32>, vector<128x512xf32>, vector<8x512xf32> -> vector<8x512xf32>
    %15 = arith.addf %13, %14 : vector<8x512xf32>
    %16 = vector.extract_strided_slice %15 {offsets = [0, 0], sizes = [8, 128], strides = [1, 1]} : vector<8x512xf32> to vector<8x128xf32>
    %17 = arith.negf %16 : vector<8x128xf32>
    %18 = math.exp %17 : vector<8x128xf32>
    %cst_13 = arith.constant 1.000000e+00 : f32
    %19 = vector.broadcast %cst_13 : f32 to vector<8x128xf32>
    %20 = arith.addf %19, %18 : vector<8x128xf32>
    %21 = arith.divf %19, %20 : vector<8x128xf32>
    %22 = vector.extract_strided_slice %15 {offsets = [0, 128], sizes = [8, 128], strides = [1, 1]} : vector<8x512xf32> to vector<8x128xf32>
    %23 = arith.negf %22 : vector<8x128xf32>
    %24 = math.exp %23 : vector<8x128xf32>
    %cst_14 = arith.constant 1.000000e+00 : f32
    %25 = vector.broadcast %cst_14 : f32 to vector<8x128xf32>
    %26 = arith.addf %25, %24 : vector<8x128xf32>
    %27 = arith.divf %25, %26 : vector<8x128xf32>
    %28 = vector.extract_strided_slice %15 {offsets = [0, 256], sizes = [8, 128], strides = [1, 1]} : vector<8x512xf32> to vector<8x128xf32>
    %29 = math.tanh %28 : vector<8x128xf32>
    %30 = vector.extract_strided_slice %15 {offsets = [0, 384], sizes = [8, 128], strides = [1, 1]} : vector<8x512xf32> to vector<8x128xf32>
    %31 = arith.negf %30 : vector<8x128xf32>
    %32 = math.exp %31 : vector<8x128xf32>
    %cst_15 = arith.constant 1.000000e+00 : f32
    %33 = vector.broadcast %cst_15 : f32 to vector<8x128xf32>
    %34 = arith.addf %33, %32 : vector<8x128xf32>
    %35 = arith.divf %33, %34 : vector<8x128xf32>
    %36 = arith.mulf %27, %9 : vector<8x128xf32>
    %37 = arith.mulf %21, %29 : vector<8x128xf32>
    %38 = arith.addf %36, %37 : vector<8x128xf32>
    %39 = math.tanh %38 : vector<8x128xf32>
    %40 = arith.mulf %35, %39 : vector<8x128xf32>
    %41 = arith.addi %7, %c0_i32_10 : i32
    %42 = vector.broadcast %41 : i32 to vector<8x1xi32>
    %43 = arith.cmpi eq, %6, %42 : vector<8x1xi32>
    %44 = vector.shape_cast %43 : vector<8x1xi1> to vector<8x1xi1>
    %45 = vector.broadcast %44 : vector<8x1xi1> to vector<8x128xi1>
    %46 = arith.select %45, %40, %10 : vector<8x128xi1>, vector<8x128xf32>
    %c1_i32_16 = arith.constant 1 : i32
    %47 = arith.index_cast %c1_i32_16 : i32 to index
    %c0_17 = arith.constant 0 : index
    %c0_18 = arith.constant 0 : index
    %48 = vector.load %arg3[%47, %c0_17, %c0_18] : memref<8x8x512xf32, #tpu.memory_space<vmem>>, vector<1x8x512xf32>
    %49 = vector.shape_cast %48 : vector<1x8x512xf32> to vector<8x512xf32>
    %cst_19 = arith.constant dense<0.000000e+00> : vector<8x512xf32>
    %50 = tpu.matmul %40, %3, %cst_19 {dimension_numbers = #tpu.dot_dimension_numbers<[1], [0], [0], [1], [0, 0, 1, 1], [], []>} : vector<8x128xf32>, vector<128x512xf32>, vector<8x512xf32> -> vector<8x512xf32>
    %51 = arith.addf %49, %50 : vector<8x512xf32>
    %52 = vector.extract_strided_slice %51 {offsets = [0, 0], sizes = [8, 128], strides = [1, 1]} : vector<8x512xf32> to vector<8x128xf32>
    %53 = arith.negf %52 : vector<8x128xf32>
    %54 = math.exp %53 : vector<8x128xf32>
    %cst_20 = arith.constant 1.000000e+00 : f32
    %55 = vector.broadcast %cst_20 : f32 to vector<8x128xf32>
    %56 = arith.addf %55, %54 : vector<8x128xf32>
    %57 = arith.divf %55, %56 : vector<8x128xf32>
    %58 = vector.extract_strided_slice %51 {offsets = [0, 128], sizes = [8, 128], strides = [1, 1]} : vector<8x512xf32> to vector<8x128xf32>
    %59 = arith.negf %58 : vector<8x128xf32>
    %60 = math.exp %59 : vector<8x128xf32>
    %cst_21 = arith.constant 1.000000e+00 : f32
    %61 = vector.broadcast %cst_21 : f32 to vector<8x128xf32>
    %62 = arith.addf %61, %60 : vector<8x128xf32>
    %63 = arith.divf %61, %62 : vector<8x128xf32>
    %64 = vector.extract_strided_slice %51 {offsets = [0, 256], sizes = [8, 128], strides = [1, 1]} : vector<8x512xf32> to vector<8x128xf32>
    %65 = math.tanh %64 : vector<8x128xf32>
    %66 = vector.extract_strided_slice %51 {offsets = [0, 384], sizes = [8, 128], strides = [1, 1]} : vector<8x512xf32> to vector<8x128xf32>
    %67 = arith.negf %66 : vector<8x128xf32>
    %68 = math.exp %67 : vector<8x128xf32>
    %cst_22 = arith.constant 1.000000e+00 : f32
    %69 = vector.broadcast %cst_22 : f32 to vector<8x128xf32>
    %70 = arith.addf %69, %68 : vector<8x128xf32>
    %71 = arith.divf %69, %70 : vector<8x128xf32>
    %72 = arith.mulf %63, %38 : vector<8x128xf32>
    %73 = arith.mulf %57, %65 : vector<8x128xf32>
    %74 = arith.addf %72, %73 : vector<8x128xf32>
    %75 = math.tanh %74 : vector<8x128xf32>
    %76 = arith.mulf %71, %75 : vector<8x128xf32>
    %77 = arith.addi %7, %c1_i32_16 : i32
    %78 = vector.broadcast %77 : i32 to vector<8x1xi32>
    %79 = arith.cmpi eq, %6, %78 : vector<8x1xi32>
    %80 = vector.shape_cast %79 : vector<8x1xi1> to vector<8x1xi1>
    %81 = vector.broadcast %80 : vector<8x1xi1> to vector<8x128xi1>
    %82 = arith.select %81, %76, %46 : vector<8x128xi1>, vector<8x128xf32>
    %c2_i32 = arith.constant 2 : i32
    %83 = arith.index_cast %c2_i32 : i32 to index
    %c0_23 = arith.constant 0 : index
    %c0_24 = arith.constant 0 : index
    %84 = vector.load %arg3[%83, %c0_23, %c0_24] : memref<8x8x512xf32, #tpu.memory_space<vmem>>, vector<1x8x512xf32>
    %85 = vector.shape_cast %84 : vector<1x8x512xf32> to vector<8x512xf32>
    %cst_25 = arith.constant dense<0.000000e+00> : vector<8x512xf32>
    %86 = tpu.matmul %76, %3, %cst_25 {dimension_numbers = #tpu.dot_dimension_numbers<[1], [0], [0], [1], [0, 0, 1, 1], [], []>} : vector<8x128xf32>, vector<128x512xf32>, vector<8x512xf32> -> vector<8x512xf32>
    %87 = arith.addf %85, %86 : vector<8x512xf32>
    %88 = vector.extract_strided_slice %87 {offsets = [0, 0], sizes = [8, 128], strides = [1, 1]} : vector<8x512xf32> to vector<8x128xf32>
    %89 = arith.negf %88 : vector<8x128xf32>
    %90 = math.exp %89 : vector<8x128xf32>
    %cst_26 = arith.constant 1.000000e+00 : f32
    %91 = vector.broadcast %cst_26 : f32 to vector<8x128xf32>
    %92 = arith.addf %91, %90 : vector<8x128xf32>
    %93 = arith.divf %91, %92 : vector<8x128xf32>
    %94 = vector.extract_strided_slice %87 {offsets = [0, 128], sizes = [8, 128], strides = [1, 1]} : vector<8x512xf32> to vector<8x128xf32>
    %95 = arith.negf %94 : vector<8x128xf32>
    %96 = math.exp %95 : vector<8x128xf32>
    %cst_27 = arith.constant 1.000000e+00 : f32
    %97 = vector.broadcast %cst_27 : f32 to vector<8x128xf32>
    %98 = arith.addf %97, %96 : vector<8x128xf32>
    %99 = arith.divf %97, %98 : vector<8x128xf32>
    %100 = vector.extract_strided_slice %87 {offsets = [0, 256], sizes = [8, 128], strides = [1, 1]} : vector<8x512xf32> to vector<8x128xf32>
    %101 = math.tanh %100 : vector<8x128xf32>
    %102 = vector.extract_strided_slice %87 {offsets = [0, 384], sizes = [8, 128], strides = [1, 1]} : vector<8x512xf32> to vector<8x128xf32>
    %103 = arith.negf %102 : vector<8x128xf32>
    %104 = math.exp %103 : vector<8x128xf32>
    %cst_28 = arith.constant 1.000000e+00 : f32
    %105 = vector.broadcast %cst_28 : f32 to vector<8x128xf32>
    %106 = arith.addf %105, %104 : vector<8x128xf32>
    %107 = arith.divf %105, %106 : vector<8x128xf32>
    %108 = arith.mulf %99, %74 : vector<8x128xf32>
    %109 = arith.mulf %93, %101 : vector<8x128xf32>
    %110 = arith.addf %108, %109 : vector<8x128xf32>
    %111 = math.tanh %110 : vector<8x128xf32>
    %112 = arith.mulf %107, %111 : vector<8x128xf32>
    %113 = arith.addi %7, %c2_i32 : i32
    %114 = vector.broadcast %113 : i32 to vector<8x1xi32>
    %115 = arith.cmpi eq, %6, %114 : vector<8x1xi32>
    %116 = vector.shape_cast %115 : vector<8x1xi1> to vector<8x1xi1>
    %117 = vector.broadcast %116 : vector<8x1xi1> to vector<8x128xi1>
    %118 = arith.select %117, %112, %82 : vector<8x128xi1>, vector<8x128xf32>
    %c3_i32 = arith.constant 3 : i32
    %119 = arith.index_cast %c3_i32 : i32 to index
    %c0_29 = arith.constant 0 : index
    %c0_30 = arith.constant 0 : index
    %120 = vector.load %arg3[%119, %c0_29, %c0_30] : memref<8x8x512xf32, #tpu.memory_space<vmem>>, vector<1x8x512xf32>
    %121 = vector.shape_cast %120 : vector<1x8x512xf32> to vector<8x512xf32>
    %cst_31 = arith.constant dense<0.000000e+00> : vector<8x512xf32>
    %122 = tpu.matmul %112, %3, %cst_31 {dimension_numbers = #tpu.dot_dimension_numbers<[1], [0], [0], [1], [0, 0, 1, 1], [], []>} : vector<8x128xf32>, vector<128x512xf32>, vector<8x512xf32> -> vector<8x512xf32>
    %123 = arith.addf %121, %122 : vector<8x512xf32>
    %124 = vector.extract_strided_slice %123 {offsets = [0, 0], sizes = [8, 128], strides = [1, 1]} : vector<8x512xf32> to vector<8x128xf32>
    %125 = arith.negf %124 : vector<8x128xf32>
    %126 = math.exp %125 : vector<8x128xf32>
    %cst_32 = arith.constant 1.000000e+00 : f32
    %127 = vector.broadcast %cst_32 : f32 to vector<8x128xf32>
    %128 = arith.addf %127, %126 : vector<8x128xf32>
    %129 = arith.divf %127, %128 : vector<8x128xf32>
    %130 = vector.extract_strided_slice %123 {offsets = [0, 128], sizes = [8, 128], strides = [1, 1]} : vector<8x512xf32> to vector<8x128xf32>
    %131 = arith.negf %130 : vector<8x128xf32>
    %132 = math.exp %131 : vector<8x128xf32>
    %cst_33 = arith.constant 1.000000e+00 : f32
    %133 = vector.broadcast %cst_33 : f32 to vector<8x128xf32>
    %134 = arith.addf %133, %132 : vector<8x128xf32>
    %135 = arith.divf %133, %134 : vector<8x128xf32>
    %136 = vector.extract_strided_slice %123 {offsets = [0, 256], sizes = [8, 128], strides = [1, 1]} : vector<8x512xf32> to vector<8x128xf32>
    %137 = math.tanh %136 : vector<8x128xf32>
    %138 = vector.extract_strided_slice %123 {offsets = [0, 384], sizes = [8, 128], strides = [1, 1]} : vector<8x512xf32> to vector<8x128xf32>
    %139 = arith.negf %138 : vector<8x128xf32>
    %140 = math.exp %139 : vector<8x128xf32>
    %cst_34 = arith.constant 1.000000e+00 : f32
    %141 = vector.broadcast %cst_34 : f32 to vector<8x128xf32>
    %142 = arith.addf %141, %140 : vector<8x128xf32>
    %143 = arith.divf %141, %142 : vector<8x128xf32>
    %144 = arith.mulf %135, %110 : vector<8x128xf32>
    %145 = arith.mulf %129, %137 : vector<8x128xf32>
    %146 = arith.addf %144, %145 : vector<8x128xf32>
    %147 = math.tanh %146 : vector<8x128xf32>
    %148 = arith.mulf %143, %147 : vector<8x128xf32>
    %149 = arith.addi %7, %c3_i32 : i32
    %150 = vector.broadcast %149 : i32 to vector<8x1xi32>
    %151 = arith.cmpi eq, %6, %150 : vector<8x1xi32>
    %152 = vector.shape_cast %151 : vector<8x1xi1> to vector<8x1xi1>
    %153 = vector.broadcast %152 : vector<8x1xi1> to vector<8x128xi1>
    %154 = arith.select %153, %148, %118 : vector<8x128xi1>, vector<8x128xf32>
    %c4_i32 = arith.constant 4 : i32
    %155 = arith.index_cast %c4_i32 : i32 to index
    %c0_35 = arith.constant 0 : index
    %c0_36 = arith.constant 0 : index
    %156 = vector.load %arg3[%155, %c0_35, %c0_36] : memref<8x8x512xf32, #tpu.memory_space<vmem>>, vector<1x8x512xf32>
    %157 = vector.shape_cast %156 : vector<1x8x512xf32> to vector<8x512xf32>
    %cst_37 = arith.constant dense<0.000000e+00> : vector<8x512xf32>
    %158 = tpu.matmul %148, %3, %cst_37 {dimension_numbers = #tpu.dot_dimension_numbers<[1], [0], [0], [1], [0, 0, 1, 1], [], []>} : vector<8x128xf32>, vector<128x512xf32>, vector<8x512xf32> -> vector<8x512xf32>
    %159 = arith.addf %157, %158 : vector<8x512xf32>
    %160 = vector.extract_strided_slice %159 {offsets = [0, 0], sizes = [8, 128], strides = [1, 1]} : vector<8x512xf32> to vector<8x128xf32>
    %161 = arith.negf %160 : vector<8x128xf32>
    %162 = math.exp %161 : vector<8x128xf32>
    %cst_38 = arith.constant 1.000000e+00 : f32
    %163 = vector.broadcast %cst_38 : f32 to vector<8x128xf32>
    %164 = arith.addf %163, %162 : vector<8x128xf32>
    %165 = arith.divf %163, %164 : vector<8x128xf32>
    %166 = vector.extract_strided_slice %159 {offsets = [0, 128], sizes = [8, 128], strides = [1, 1]} : vector<8x512xf32> to vector<8x128xf32>
    %167 = arith.negf %166 : vector<8x128xf32>
    %168 = math.exp %167 : vector<8x128xf32>
    %cst_39 = arith.constant 1.000000e+00 : f32
    %169 = vector.broadcast %cst_39 : f32 to vector<8x128xf32>
    %170 = arith.addf %169, %168 : vector<8x128xf32>
    %171 = arith.divf %169, %170 : vector<8x128xf32>
    %172 = vector.extract_strided_slice %159 {offsets = [0, 256], sizes = [8, 128], strides = [1, 1]} : vector<8x512xf32> to vector<8x128xf32>
    %173 = math.tanh %172 : vector<8x128xf32>
    %174 = vector.extract_strided_slice %159 {offsets = [0, 384], sizes = [8, 128], strides = [1, 1]} : vector<8x512xf32> to vector<8x128xf32>
    %175 = arith.negf %174 : vector<8x128xf32>
    %176 = math.exp %175 : vector<8x128xf32>
    %cst_40 = arith.constant 1.000000e+00 : f32
    %177 = vector.broadcast %cst_40 : f32 to vector<8x128xf32>
    %178 = arith.addf %177, %176 : vector<8x128xf32>
    %179 = arith.divf %177, %178 : vector<8x128xf32>
    %180 = arith.mulf %171, %146 : vector<8x128xf32>
    %181 = arith.mulf %165, %173 : vector<8x128xf32>
    %182 = arith.addf %180, %181 : vector<8x128xf32>
    %183 = math.tanh %182 : vector<8x128xf32>
    %184 = arith.mulf %179, %183 : vector<8x128xf32>
    %185 = arith.addi %7, %c4_i32 : i32
    %186 = vector.broadcast %185 : i32 to vector<8x1xi32>
    %187 = arith.cmpi eq, %6, %186 : vector<8x1xi32>
    %188 = vector.shape_cast %187 : vector<8x1xi1> to vector<8x1xi1>
    %189 = vector.broadcast %188 : vector<8x1xi1> to vector<8x128xi1>
    %190 = arith.select %189, %184, %154 : vector<8x128xi1>, vector<8x128xf32>
    %c5_i32 = arith.constant 5 : i32
    %191 = arith.index_cast %c5_i32 : i32 to index
    %c0_41 = arith.constant 0 : index
    %c0_42 = arith.constant 0 : index
    %192 = vector.load %arg3[%191, %c0_41, %c0_42] : memref<8x8x512xf32, #tpu.memory_space<vmem>>, vector<1x8x512xf32>
    %193 = vector.shape_cast %192 : vector<1x8x512xf32> to vector<8x512xf32>
    %cst_43 = arith.constant dense<0.000000e+00> : vector<8x512xf32>
    %194 = tpu.matmul %184, %3, %cst_43 {dimension_numbers = #tpu.dot_dimension_numbers<[1], [0], [0], [1], [0, 0, 1, 1], [], []>} : vector<8x128xf32>, vector<128x512xf32>, vector<8x512xf32> -> vector<8x512xf32>
    %195 = arith.addf %193, %194 : vector<8x512xf32>
    %196 = vector.extract_strided_slice %195 {offsets = [0, 0], sizes = [8, 128], strides = [1, 1]} : vector<8x512xf32> to vector<8x128xf32>
    %197 = arith.negf %196 : vector<8x128xf32>
    %198 = math.exp %197 : vector<8x128xf32>
    %cst_44 = arith.constant 1.000000e+00 : f32
    %199 = vector.broadcast %cst_44 : f32 to vector<8x128xf32>
    %200 = arith.addf %199, %198 : vector<8x128xf32>
    %201 = arith.divf %199, %200 : vector<8x128xf32>
    %202 = vector.extract_strided_slice %195 {offsets = [0, 128], sizes = [8, 128], strides = [1, 1]} : vector<8x512xf32> to vector<8x128xf32>
    %203 = arith.negf %202 : vector<8x128xf32>
    %204 = math.exp %203 : vector<8x128xf32>
    %cst_45 = arith.constant 1.000000e+00 : f32
    %205 = vector.broadcast %cst_45 : f32 to vector<8x128xf32>
    %206 = arith.addf %205, %204 : vector<8x128xf32>
    %207 = arith.divf %205, %206 : vector<8x128xf32>
    %208 = vector.extract_strided_slice %195 {offsets = [0, 256], sizes = [8, 128], strides = [1, 1]} : vector<8x512xf32> to vector<8x128xf32>
    %209 = math.tanh %208 : vector<8x128xf32>
    %210 = vector.extract_strided_slice %195 {offsets = [0, 384], sizes = [8, 128], strides = [1, 1]} : vector<8x512xf32> to vector<8x128xf32>
    %211 = arith.negf %210 : vector<8x128xf32>
    %212 = math.exp %211 : vector<8x128xf32>
    %cst_46 = arith.constant 1.000000e+00 : f32
    %213 = vector.broadcast %cst_46 : f32 to vector<8x128xf32>
    %214 = arith.addf %213, %212 : vector<8x128xf32>
    %215 = arith.divf %213, %214 : vector<8x128xf32>
    %216 = arith.mulf %207, %182 : vector<8x128xf32>
    %217 = arith.mulf %201, %209 : vector<8x128xf32>
    %218 = arith.addf %216, %217 : vector<8x128xf32>
    %219 = math.tanh %218 : vector<8x128xf32>
    %220 = arith.mulf %215, %219 : vector<8x128xf32>
    %221 = arith.addi %7, %c5_i32 : i32
    %222 = vector.broadcast %221 : i32 to vector<8x1xi32>
    %223 = arith.cmpi eq, %6, %222 : vector<8x1xi32>
    %224 = vector.shape_cast %223 : vector<8x1xi1> to vector<8x1xi1>
    %225 = vector.broadcast %224 : vector<8x1xi1> to vector<8x128xi1>
    %226 = arith.select %225, %220, %190 : vector<8x128xi1>, vector<8x128xf32>
    %c6_i32 = arith.constant 6 : i32
    %227 = arith.index_cast %c6_i32 : i32 to index
    %c0_47 = arith.constant 0 : index
    %c0_48 = arith.constant 0 : index
    %228 = vector.load %arg3[%227, %c0_47, %c0_48] : memref<8x8x512xf32, #tpu.memory_space<vmem>>, vector<1x8x512xf32>
    %229 = vector.shape_cast %228 : vector<1x8x512xf32> to vector<8x512xf32>
    %cst_49 = arith.constant dense<0.000000e+00> : vector<8x512xf32>
    %230 = tpu.matmul %220, %3, %cst_49 {dimension_numbers = #tpu.dot_dimension_numbers<[1], [0], [0], [1], [0, 0, 1, 1], [], []>} : vector<8x128xf32>, vector<128x512xf32>, vector<8x512xf32> -> vector<8x512xf32>
    %231 = arith.addf %229, %230 : vector<8x512xf32>
    %232 = vector.extract_strided_slice %231 {offsets = [0, 0], sizes = [8, 128], strides = [1, 1]} : vector<8x512xf32> to vector<8x128xf32>
    %233 = arith.negf %232 : vector<8x128xf32>
    %234 = math.exp %233 : vector<8x128xf32>
    %cst_50 = arith.constant 1.000000e+00 : f32
    %235 = vector.broadcast %cst_50 : f32 to vector<8x128xf32>
    %236 = arith.addf %235, %234 : vector<8x128xf32>
    %237 = arith.divf %235, %236 : vector<8x128xf32>
    %238 = vector.extract_strided_slice %231 {offsets = [0, 128], sizes = [8, 128], strides = [1, 1]} : vector<8x512xf32> to vector<8x128xf32>
    %239 = arith.negf %238 : vector<8x128xf32>
    %240 = math.exp %239 : vector<8x128xf32>
    %cst_51 = arith.constant 1.000000e+00 : f32
    %241 = vector.broadcast %cst_51 : f32 to vector<8x128xf32>
    %242 = arith.addf %241, %240 : vector<8x128xf32>
    %243 = arith.divf %241, %242 : vector<8x128xf32>
    %244 = vector.extract_strided_slice %231 {offsets = [0, 256], sizes = [8, 128], strides = [1, 1]} : vector<8x512xf32> to vector<8x128xf32>
    %245 = math.tanh %244 : vector<8x128xf32>
    %246 = vector.extract_strided_slice %231 {offsets = [0, 384], sizes = [8, 128], strides = [1, 1]} : vector<8x512xf32> to vector<8x128xf32>
    %247 = arith.negf %246 : vector<8x128xf32>
    %248 = math.exp %247 : vector<8x128xf32>
    %cst_52 = arith.constant 1.000000e+00 : f32
    %249 = vector.broadcast %cst_52 : f32 to vector<8x128xf32>
    %250 = arith.addf %249, %248 : vector<8x128xf32>
    %251 = arith.divf %249, %250 : vector<8x128xf32>
    %252 = arith.mulf %243, %218 : vector<8x128xf32>
    %253 = arith.mulf %237, %245 : vector<8x128xf32>
    %254 = arith.addf %252, %253 : vector<8x128xf32>
    %255 = math.tanh %254 : vector<8x128xf32>
    %256 = arith.mulf %251, %255 : vector<8x128xf32>
    %257 = arith.addi %7, %c6_i32 : i32
    %258 = vector.broadcast %257 : i32 to vector<8x1xi32>
    %259 = arith.cmpi eq, %6, %258 : vector<8x1xi32>
    %260 = vector.shape_cast %259 : vector<8x1xi1> to vector<8x1xi1>
    %261 = vector.broadcast %260 : vector<8x1xi1> to vector<8x128xi1>
    %262 = arith.select %261, %256, %226 : vector<8x128xi1>, vector<8x128xf32>
    %c7_i32 = arith.constant 7 : i32
    %263 = arith.index_cast %c7_i32 : i32 to index
    %c0_53 = arith.constant 0 : index
    %c0_54 = arith.constant 0 : index
    %264 = vector.load %arg3[%263, %c0_53, %c0_54] : memref<8x8x512xf32, #tpu.memory_space<vmem>>, vector<1x8x512xf32>
    %265 = vector.shape_cast %264 : vector<1x8x512xf32> to vector<8x512xf32>
    %cst_55 = arith.constant dense<0.000000e+00> : vector<8x512xf32>
    %266 = tpu.matmul %256, %3, %cst_55 {dimension_numbers = #tpu.dot_dimension_numbers<[1], [0], [0], [1], [0, 0, 1, 1], [], []>} : vector<8x128xf32>, vector<128x512xf32>, vector<8x512xf32> -> vector<8x512xf32>
    %267 = arith.addf %265, %266 : vector<8x512xf32>
    %268 = vector.extract_strided_slice %267 {offsets = [0, 0], sizes = [8, 128], strides = [1, 1]} : vector<8x512xf32> to vector<8x128xf32>
    %269 = arith.negf %268 : vector<8x128xf32>
    %270 = math.exp %269 : vector<8x128xf32>
    %cst_56 = arith.constant 1.000000e+00 : f32
    %271 = vector.broadcast %cst_56 : f32 to vector<8x128xf32>
    %272 = arith.addf %271, %270 : vector<8x128xf32>
    %273 = arith.divf %271, %272 : vector<8x128xf32>
    %274 = vector.extract_strided_slice %267 {offsets = [0, 128], sizes = [8, 128], strides = [1, 1]} : vector<8x512xf32> to vector<8x128xf32>
    %275 = arith.negf %274 : vector<8x128xf32>
    %276 = math.exp %275 : vector<8x128xf32>
    %cst_57 = arith.constant 1.000000e+00 : f32
    %277 = vector.broadcast %cst_57 : f32 to vector<8x128xf32>
    %278 = arith.addf %277, %276 : vector<8x128xf32>
    %279 = arith.divf %277, %278 : vector<8x128xf32>
    %280 = vector.extract_strided_slice %267 {offsets = [0, 256], sizes = [8, 128], strides = [1, 1]} : vector<8x512xf32> to vector<8x128xf32>
    %281 = math.tanh %280 : vector<8x128xf32>
    %282 = vector.extract_strided_slice %267 {offsets = [0, 384], sizes = [8, 128], strides = [1, 1]} : vector<8x512xf32> to vector<8x128xf32>
    %283 = arith.negf %282 : vector<8x128xf32>
    %284 = math.exp %283 : vector<8x128xf32>
    %cst_58 = arith.constant 1.000000e+00 : f32
    %285 = vector.broadcast %cst_58 : f32 to vector<8x128xf32>
    %286 = arith.addf %285, %284 : vector<8x128xf32>
    %287 = arith.divf %285, %286 : vector<8x128xf32>
    %288 = arith.mulf %279, %254 : vector<8x128xf32>
    %289 = arith.mulf %273, %281 : vector<8x128xf32>
    %290 = arith.addf %288, %289 : vector<8x128xf32>
    %291 = math.tanh %290 : vector<8x128xf32>
    %292 = arith.mulf %287, %291 : vector<8x128xf32>
    %293 = arith.addi %7, %c7_i32 : i32
    %294 = vector.broadcast %293 : i32 to vector<8x1xi32>
    %295 = arith.cmpi eq, %6, %294 : vector<8x1xi32>
    %296 = vector.shape_cast %295 : vector<8x1xi1> to vector<8x1xi1>
    %297 = vector.broadcast %296 : vector<8x1xi1> to vector<8x128xi1>
    %298 = arith.select %297, %292, %262 : vector<8x128xi1>, vector<8x128xf32>
    %c8_i32_59 = arith.constant 8 : i32
    %c0_60 = arith.constant 0 : index
    %c0_61 = arith.constant 0 : index
    %299 = vector.load %arg8[%c0_60, %c0_61] : memref<8x128xf32, #tpu.memory_space<vmem>>, vector<8x128xf32>
    tpu.vector_store %arg8[%c0_60, %c0_61], %292 {strides = array<i32>} : memref<8x128xf32, #tpu.memory_space<vmem>>, vector<8x128xf32>,
    %c0_62 = arith.constant 0 : index
    %c0_63 = arith.constant 0 : index
    %300 = vector.load %arg9[%c0_62, %c0_63] : memref<8x128xf32, #tpu.memory_space<vmem>>, vector<8x128xf32>
    tpu.vector_store %arg9[%c0_62, %c0_63], %290 {strides = array<i32>} : memref<8x128xf32, #tpu.memory_space<vmem>>, vector<8x128xf32>,
    %c0_64 = arith.constant 0 : index
    %c0_65 = arith.constant 0 : index
    %301 = vector.load %arg10[%c0_64, %c0_65] : memref<8x128xf32, #tpu.memory_space<vmem>>, vector<8x128xf32>
    tpu.vector_store %arg10[%c0_64, %c0_65], %298 {strides = array<i32>} : memref<8x128xf32, #tpu.memory_space<vmem>>, vector<8x128xf32>,
    %c0_i32_66 = arith.constant 0 : i32
    %302 = arith.cmpi eq, %arg1, %c0_i32_66 : i32
    %303 = arith.extui %302 : i1 to i32
    %c0_i32_67 = arith.constant 0 : i32
    %304 = arith.cmpi ne, %303, %c0_i32_67 : i32
    scf.if %304 {
      %c0_68 = arith.constant 0 : index
      %c0_69 = arith.constant 0 : index
      %305 = vector.load %arg5[%c0_68, %c0_69] : memref<128x1xf32, #tpu.memory_space<vmem>>, vector<128x1xf32>
      %cst_70 = arith.constant dense<0.000000e+00> : vector<8x1xf32>
      %306 = tpu.matmul %298, %305, %cst_70 {dimension_numbers = #tpu.dot_dimension_numbers<[1], [0], [0], [1], [0, 0, 1, 1], [], []>} : vector<8x128xf32>, vector<128x1xf32>, vector<8x1xf32> -> vector<8x1xf32>
      %c0_71 = arith.constant 0 : index
      %c0_72 = arith.constant 0 : index
      %307 = vector.load %arg6[%c0_71, %c0_72] : memref<1x1xf32, #tpu.memory_space<vmem>>, vector<1x1xf32>
      %308 = vector.broadcast %307 : vector<1x1xf32> to vector<8x1xf32>
      %309 = arith.addf %306, %308 : vector<8x1xf32>
      %310 = arith.negf %309 : vector<8x1xf32>
      %311 = math.exp %310 : vector<8x1xf32>
      %cst_73 = arith.constant 1.000000e+00 : f32
      %312 = vector.broadcast %cst_73 : f32 to vector<8x1xf32>
      %313 = arith.addf %312, %311 : vector<8x1xf32>
      %314 = arith.divf %312, %313 : vector<8x1xf32>
      %315 = tpu.iota {dimensions = array<i32: 1>} : vector<8x2xi32>
      %c1_i32_74 = arith.constant 1 : i32
      %316 = vector.broadcast %c1_i32_74 : i32 to vector<8x2xi32>
      %317 = arith.cmpi eq, %315, %316 : vector<8x2xi32>
      %cst_75 = arith.constant 1.000000e+00 : f32
      %318 = vector.broadcast %cst_75 : f32 to vector<8x1xf32>
      %319 = arith.subf %318, %314 : vector<8x1xf32>
      %320 = vector.shape_cast %314 : vector<8x1xf32> to vector<8x1xf32>
      %321 = vector.broadcast %320 : vector<8x1xf32> to vector<8x2xf32>
      %322 = vector.shape_cast %319 : vector<8x1xf32> to vector<8x1xf32>
      %323 = vector.broadcast %322 : vector<8x1xf32> to vector<8x2xf32>
      %324 = arith.select %317, %321, %323 : vector<8x2xi1>, vector<8x2xf32>
      %c0_76 = arith.constant 0 : index
      %c0_77 = arith.constant 0 : index
      %325 = vector.load %arg7[%c0_76, %c0_77] : memref<8x2xf32, #tpu.memory_space<vmem>>, vector<8x2xf32>
      tpu.vector_store %arg7[%c0_76, %c0_77], %324 {strides = array<i32>} : memref<8x2xf32, #tpu.memory_space<vmem>>, vector<8x2xf32>,
    } else {
    }
    return
  }
  func.func @transform_0(%arg0: i32, %arg1: i32) -> (i32, i32) {
    %c0_i32 = arith.constant 0 : i32
    %c0_i32_0 = arith.constant 0 : i32
    return %arg0, %c0_i32 : i32, i32
  }
  func.func @transform_1(%arg0: i32, %arg1: i32) -> (i32, i32, i32) {
    %c0_i32 = arith.constant 0 : i32
    %c0_i32_0 = arith.constant 0 : i32
    return %arg1, %arg0, %c0_i32 : i32, i32, i32
  }
  func.func @transform_2(%arg0: i32, %arg1: i32) -> (i32, i32) {
    %c0_i32 = arith.constant 0 : i32
    %c0_i32_0 = arith.constant 0 : i32
    %c0_i32_1 = arith.constant 0 : i32
    return %c0_i32, %c0_i32_0 : i32, i32
  }
  func.func @transform_3(%arg0: i32, %arg1: i32) -> (i32, i32) {
    %c0_i32 = arith.constant 0 : i32
    %c0_i32_0 = arith.constant 0 : i32
    %c0_i32_1 = arith.constant 0 : i32
    return %c0_i32, %c0_i32_0 : i32, i32
  }
  func.func @transform_4(%arg0: i32, %arg1: i32) -> (i32, i32) {
    %c0_i32 = arith.constant 0 : i32
    %c0_i32_0 = arith.constant 0 : i32
    %c0_i32_1 = arith.constant 0 : i32
    return %c0_i32, %c0_i32_0 : i32, i32
  }
  func.func @transform_5(%arg0: i32, %arg1: i32) -> (i32, i32) {
    %c0_i32 = arith.constant 0 : i32
    %c0_i32_0 = arith.constant 0 : i32
    return %arg0, %c0_i32 : i32, i32
  }
}

</mosaic_0001>

<llo_original>
// kernel: rnn_binary_classifier_forward.1
$region0: #{rnn_binary_classifier_forward.1}
  #allocation0 [shape = 'u32[]', space=smem, size = 0x4, offset = 0x4, fixed_abs, tag = 'smem constant byte address 0x4 - core index']
  #allocation1 [shape = 'u32[144,128]{1,0:T(1,128)}', space=vmem, size = 0x12000, scoped, tag = 'internal scratch']
  #allocation2 [shape = 'f32[8,128]{1,0:T(8,128)}', space=vmem, size = 0x1000, scoped, tag = 'scratch operand']
  #allocation3 [shape = 'f32[8,128]{1,0:T(8,128)}', space=vmem, size = 0x1000, scoped, tag = 'scratch operand']
  #allocation4 [shape = 'f32[8,128]{1,0:T(8,128)}', space=vmem, size = 0x1000, scoped, tag = 'scratch operand']
  #allocation5 [shape = 'f32[1,1]{1,0:T(1,128)S(1)}', space=vmem, size = 0x200, scoped, tag = 'scoped memory for rnn_binary_classifier_forward.1']
  %s0 = inlined_call_operand.hbm [shape: s32[8,1], index: 0, kind: input, shape index: {}]
  %s1 = inlined_call_operand.hbm [shape: f32[8,8,512], index: 1, kind: input, shape index: {}]
  %s2 = inlined_call_operand.hbm [shape: f32[128,512], index: 2, kind: input, shape index: {}]
  %s3 = inlined_call_operand.hbm [shape: f32[128,1], index: 3, kind: input, shape index: {}]
  %s4 = inlined_call_operand.<no memory space> [shape: f32[1,1], index: 4, kind: input, shape index: {}]
  %s5 = inlined_call_operand.hbm [shape: f32[8,2], index: 5, kind: output, shape index: {}]
  %s6 = sld [smem:[#allocation0]]
  $region54: #{rnn_binary_classifier_forward.1} parent=0
    _
  %s8 = ssub.s32 1, %s6
  %s9 = scalar_select 0, %s8, %s6
  %v10 = vstv %s4
  %11 = vst [vmem:[#allocation5] sm:$0x1] %v10
  $region1: #{rnn_binary_classifier_forward.1} parent=0
    #allocation6 [shape = 'u8[4096]{0}', space=vmem, size = 0x1000, scoped, tag = 'input window, operand 0, single buffered']
    #allocation7 [shape = 's32[1]{0}', space=sflag, size = 0x4, scoped, tag = 'scoped memory for rnn_binary_classifier_forward.1']
    #allocation8 [shape = 's32[1]{0}', space=sflag, size = 0x4, scoped, tag = 'scoped memory for rnn_binary_classifier_forward.1']
    #allocation9 [shape = 'u8[131072]{0}', space=vmem, size = 0x20000, scoped, tag = 'input window, operand 1, single buffered']
    #allocation10 [shape = 's32[1]{0}', space=sflag, size = 0x4, scoped, tag = 'scoped memory for rnn_binary_classifier_forward.1']
    #allocation11 [shape = 'u8[262144]{0}', space=vmem, size = 0x40000, scoped, tag = 'input window, operand 2, single buffered']
    #allocation12 [shape = 'u8[65536]{0}', space=vmem, size = 0x10000, scoped, tag = 'input window, operand 3, single buffered']
    #allocation13 [shape = 's32[1]{0}', space=sflag, size = 0x4, scoped, tag = 'scoped memory for rnn_binary_classifier_forward.1']
    #allocation14 [shape = 'u8[4096]{0}', space=vmem, size = 0x1000, scoped, tag = 'output window, operand 0, single buffered']
    %12 = vsyncpa [#allocation7], 0
    %13 = vsyncpa [#allocation10], 0
    %14 = vsyncpa [#allocation13], 0
    %15 = vsyncpa [#allocation8], 0
    // Predicated region
    $region2: #{rnn_binary_classifier_forward.1} parent=1 // pred_check
      _
    $region3: #{rnn_binary_classifier_forward.1} parent=1 // pred_check_branch
      %17 = sbr.rel (0) target = $region5
    $region4: #{rnn_binary_classifier_forward.1} parent=1 // pred_region
      %s19 = ssub.s32 128, 128
      %20 = vsyncadd [#allocation7], %s19
      %s22 = sshll.u32 [#allocation6], 4
      %s23 = int_to_ptr.vmem [resolvable:$true] %s22
      %25 = dma.hbm_to_vmem [thread:$0]  %s0, 128, %s23, [#allocation7]
    $region5: #{rnn_binary_classifier_forward.1} parent=1 // pred_fallthru
      _
    // Predicated region
    $region6: #{rnn_binary_classifier_forward.1} parent=1 // pred_check
      _
    $region7: #{rnn_binary_classifier_forward.1} parent=1 // pred_check_branch
      %27 = sbr.rel (0) target = $region9
    $region8: #{rnn_binary_classifier_forward.1} parent=1 // pred_region
      %s29 = ssub.s32 4096, 4096
      %30 = vsyncadd [#allocation10], %s29
      %s31 = sshll.u32 [#allocation9], 4
      %s32 = int_to_ptr.vmem [resolvable:$true] %s31
      %37 = dma.hbm_to_vmem [thread:$0]  %s1, 4096, %s32, [#allocation10], 512, 512, 32
    $region9: #{rnn_binary_classifier_forward.1} parent=1 // pred_fallthru
      _
    // Predicated region
    $region10: #{rnn_binary_classifier_forward.1} parent=1 // pred_check
      _
    $region11: #{rnn_binary_classifier_forward.1} parent=1 // pred_check_branch
      %39 = sbr.rel (0) target = $region13
    $region12: #{rnn_binary_classifier_forward.1} parent=1 // pred_region
      %s41 = ssub.s32 8192, 8192
      %42 = vsyncadd [#allocation10], %s41
      %s43 = sshll.u32 [#allocation11], 4
      %s44 = int_to_ptr.vmem [resolvable:$true] %s43
      %49 = dma.hbm_to_vmem [thread:$0]  %s2, 8192, %s44, [#allocation10], 512, 512, 32
    $region13: #{rnn_binary_classifier_forward.1} parent=1 // pred_fallthru
      _
    // Predicated region
    $region14: #{rnn_binary_classifier_forward.1} parent=1 // pred_check
      _
    $region15: #{rnn_binary_classifier_forward.1} parent=1 // pred_check_branch
      %51 = sbr.rel (0) target = $region17
    $region16: #{rnn_binary_classifier_forward.1} parent=1 // pred_region
      %s53 = ssub.s32 2048, 2048
      %54 = vsyncadd [#allocation13], %s53
      %s55 = sshll.u32 [#allocation12], 4
      %s56 = int_to_ptr.vmem [resolvable:$true] %s55
      %61 = dma.hbm_to_vmem [thread:$0]  %s3, 2048, %s56, [#allocation13], 128, 128, 8
    $region17: #{rnn_binary_classifier_forward.1} parent=1 // pred_fallthru
      _
    // Predicated region
    $region18: #{rnn_binary_classifier_forward.1} parent=1 // pred_check
      _
    $region19: #{rnn_binary_classifier_forward.1} parent=1 // pred_check_branch
      %63 = sbr.rel (0) target = $region21
    $region20: #{rnn_binary_classifier_forward.1} parent=1 // pred_region
      _
    $region21: #{rnn_binary_classifier_forward.1} parent=1 // pred_fallthru
      _
    // Predicated region
    $region22: #{rnn_binary_classifier_forward.1} parent=1 // pred_check
      _
    $region23: #{rnn_binary_classifier_forward.1} parent=1 // pred_check_branch
      %65 = sbr.rel (0) target = $region25
    $region24: #{rnn_binary_classifier_forward.1} parent=1 // pred_region
      %66 = dma.done [#allocation7], 128
    $region25: #{rnn_binary_classifier_forward.1} parent=1 // pred_fallthru
      _
    // Predicated region
    $region26: #{rnn_binary_classifier_forward.1} parent=1 // pred_check
      _
    $region27: #{rnn_binary_classifier_forward.1} parent=1 // pred_check_branch
      %68 = sbr.rel (0) target = $region29
    $region28: #{rnn_binary_classifier_forward.1} parent=1 // pred_region
      %69 = dma.done [#allocation10], 4096
    $region29: #{rnn_binary_classifier_forward.1} parent=1 // pred_fallthru
      _
    // Predicated region
    $region30: #{rnn_binary_classifier_forward.1} parent=1 // pred_check
      _
    $region31: #{rnn_binary_classifier_forward.1} parent=1 // pred_check_branch
      %71 = sbr.rel (0) target = $region33
    $region32: #{rnn_binary_classifier_forward.1} parent=1 // pred_region
      %72 = dma.done [#allocation10], 8192
    $region33: #{rnn_binary_classifier_forward.1} parent=1 // pred_fallthru
      _
    // Predicated region
    $region34: #{rnn_binary_classifier_forward.1} parent=1 // pred_check
      _
    $region35: #{rnn_binary_classifier_forward.1} parent=1 // pred_check_branch
      %74 = sbr.rel (0) target = $region37
    $region36: #{rnn_binary_classifier_forward.1} parent=1 // pred_region
      %75 = dma.done [#allocation13], 2048
    $region37: #{rnn_binary_classifier_forward.1} parent=1 // pred_fallthru
      _
    %p76 = scmp.eq.s32.totalorder 0, 0
    // Predicated region
    $region38: #{rnn_binary_classifier_forward.1} parent=1 // pred_check
      %p77 = pneg %p76
    $region39: #{rnn_binary_classifier_forward.1} parent=1 // pred_check_branch
      %79 = sbr.rel (%p77) target = $region41
    $region40: #{rnn_binary_classifier_forward.1} parent=1 // pred_region
      %80 = vst [vmem:[#allocation2] sm:$0xff] 0.0
      %81 = vst [vmem:[#allocation3] sm:$0xff] 0.0
      %82 = vst [vmem:[#allocation4] sm:$0xff] 0.0
    $region41: #{rnn_binary_classifier_forward.1} parent=1 // pred_fallthru
      _
    %v83 = vld [vmem:[#allocation11] sm:$0xff]
    %v84 = vld [vmem:[#allocation11 + $0x8] sm:$0xff]
    %v85 = vld [vmem:[#allocation11 + $0x10] sm:$0xff]
    %v86 = vld [vmem:[#allocation11 + $0x18] sm:$0xff]
    %v87 = vld [vmem:[#allocation11 + $0x20] sm:$0xff]
    %v88 = vld [vmem:[#allocation11 + $0x28] sm:$0xff]
    %v89 = vld [vmem:[#allocation11 + $0x30] sm:$0xff]
    %v90 = vld [vmem:[#allocation11 + $0x38] sm:$0xff]
    %v91 = vld [vmem:[#allocation11 + $0x40] sm:$0xff]
    %v92 = vld [vmem:[#allocation11 + $0x48] sm:$0xff]
    %v93 = vld [vmem:[#allocation11 + $0x50] sm:$0xff]
    %v94 = vld [vmem:[#allocation11 + $0x58] sm:$0xff]
    %v95 = vld [vmem:[#allocation11 + $0x60] sm:$0xff]
    %v96 = vld [vmem:[#allocation11 + $0x68] sm:$0xff]
    %v97 = vld [vmem:[#allocation11 + $0x70] sm:$0xff]
    %v98 = vld [vmem:[#allocation11 + $0x78] sm:$0xff]
    %v99 = vld [vmem:[#allocation11 + $0x80] sm:$0xff]
    %v100 = vld [vmem:[#allocation11 + $0x88] sm:$0xff]
    %v101 = vld [vmem:[#allocation11 + $0x90] sm:$0xff]
    %v102 = vld [vmem:[#allocation11 + $0x98] sm:$0xff]
    %v103 = vld [vmem:[#allocation11 + $0xa0] sm:$0xff]
    %v104 = vld [vmem:[#allocation11 + $0xa8] sm:$0xff]
    %v105 = vld [vmem:[#allocation11 + $0xb0] sm:$0xff]
    %v106 = vld [vmem:[#allocation11 + $0xb8] sm:$0xff]
    %v107 = vld [vmem:[#allocation11 + $0xc0] sm:$0xff]
    %v108 = vld [vmem:[#allocation11 + $0xc8] sm:$0xff]
    %v109 = vld [vmem:[#allocation11 + $0xd0] sm:$0xff]
    %v110 = vld [vmem:[#allocation11 + $0xd8] sm:$0xff]
    %v111 = vld [vmem:[#allocation11 + $0xe0] sm:$0xff]
    %v112 = vld [vmem:[#allocation11 + $0xe8] sm:$0xff]
    %v113 = vld [vmem:[#allocation11 + $0xf0] sm:$0xff]
    %v114 = vld [vmem:[#allocation11 + $0xf8] sm:$0xff]
    %v115 = vld [vmem:[#allocation11 + $0x100] sm:$0xff]
    %v116 = vld [vmem:[#allocation11 + $0x108] sm:$0xff]
    %v117 = vld [vmem:[#allocation11 + $0x110] sm:$0xff]
    %v118 = vld [vmem:[#allocation11 + $0x118] sm:$0xff]
    %v119 = vld [vmem:[#allocation11 + $0x120] sm:$0xff]
    %v120 = vld [vmem:[#allocation11 + $0x128] sm:$0xff]
    %v121 = vld [vmem:[#allocation11 + $0x130] sm:$0xff]
    %v122 = vld [vmem:[#allocation11 + $0x138] sm:$0xff]
    %v123 = vld [vmem:[#allocation11 + $0x140] sm:$0xff]
    %v124 = vld [vmem:[#allocation11 + $0x148] sm:$0xff]
    %v125 = vld [vmem:[#allocation11 + $0x150] sm:$0xff]
    %v126 = vld [vmem:[#allocation11 + $0x158] sm:$0xff]
    %v127 = vld [vmem:[#allocation11 + $0x160] sm:$0xff]
    %v128 = vld [vmem:[#allocation11 + $0x168] sm:$0xff]
    %v129 = vld [vmem:[#allocation11 + $0x170] sm:$0xff]
    %v130 = vld [vmem:[#allocation11 + $0x178] sm:$0xff]
    %v131 = vld [vmem:[#allocation11 + $0x180] sm:$0xff]
    %v132 = vld [vmem:[#allocation11 + $0x188] sm:$0xff]
    %v133 = vld [vmem:[#allocation11 + $0x190] sm:$0xff]
    %v134 = vld [vmem:[#allocation11 + $0x198] sm:$0xff]
    %v135 = vld [vmem:[#allocation11 + $0x1a0] sm:$0xff]
    %v136 = vld [vmem:[#allocation11 + $0x1a8] sm:$0xff]
    %v137 = vld [vmem:[#allocation11 + $0x1b0] sm:$0xff]
    %v138 = vld [vmem:[#allocation11 + $0x1b8] sm:$0xff]
    %v139 = vld [vmem:[#allocation11 + $0x1c0] sm:$0xff]
    %v140 = vld [vmem:[#allocation11 + $0x1c8] sm:$0xff]
    %v141 = vld [vmem:[#allocation11 + $0x1d0] sm:$0xff]
    %v142 = vld [vmem:[#allocation11 + $0x1d8] sm:$0xff]
    %v143 = vld [vmem:[#allocation11 + $0x1e0] sm:$0xff]
    %v144 = vld [vmem:[#allocation11 + $0x1e8] sm:$0xff]
    %v145 = vld [vmem:[#allocation11 + $0x1f0] sm:$0xff]
    %v146 = vld [vmem:[#allocation11 + $0x1f8] sm:$0xff]
    %v147 = vld [vmem:[#allocation6] sm:$0xff]
    %v148 = vsub.s32 %v147, 1
    %s149 = smul.u32 0, 8
    %v150 = vld [vmem:[#allocation2] sm:$0xff]
    %v151 = vld [vmem:[#allocation3] sm:$0xff]
    %v152 = vld [vmem:[#allocation4] sm:$0xff]
    %v153 = vld [vmem:[#allocation9] sm:$0xff]
    %v154 = vld [vmem:[#allocation9 + $0x8] sm:$0xff]
    %v155 = vld [vmem:[#allocation9 + $0x10] sm:$0xff]
    %v156 = vld [vmem:[#allocation9 + $0x18] sm:$0xff]
    %157 = vmatprep.subr.mxu0 %v84
    %158 = vmatpush1.msra.mxu0 %v83
    %159 = vmatprep.subr.mxu0 %v88
    %160 = vmatpush1.msra.mxu0 %v87
    %161 = vmatprep.subr.mxu0 %v92
    %162 = vmatpush1.msra.mxu0 %v91
    %163 = vmatprep.subr.mxu0 %v96
    %164 = vmatpush1.msra.mxu0 %v95
    %165 = vmatprep.subr.mxu0 %v100
    %166 = vmatpush1.msra.mxu0 %v99
    %167 = vmatprep.subr.mxu0 %v104
    %168 = vmatpush1.msra.mxu0 %v103
    %169 = vmatprep.subr.mxu0 %v108
    %170 = vmatpush1.msra.mxu0 %v107
    %171 = vmatprep.subr.mxu0 %v112
    %172 = vmatpush1.msra.mxu0 %v111
    %173 = vmatprep.subr.mxu0 %v116
    %174 = vmatpush1.msra.mxu0 %v115
    %175 = vmatprep.subr.mxu0 %v120
    %176 = vmatpush1.msra.mxu0 %v119
    %177 = vmatprep.subr.mxu0 %v124
    %178 = vmatpush1.msra.mxu0 %v123
    %179 = vmatprep.subr.mxu0 %v128
    %180 = vmatpush1.msra.mxu0 %v127
    %181 = vmatprep.subr.mxu0 %v132
    %182 = vmatpush1.msra.mxu0 %v131
    %183 = vmatprep.subr.mxu0 %v136
    %184 = vmatpush1.msra.mxu0 %v135
    %185 = vmatprep.subr.mxu0 %v140
    %186 = vmatpush1.msra.mxu0 %v139
    %187 = vmatprep.subr.mxu0 %v144
    %188 = vmatpush1.msra.mxu0 %v143
    %189 = vmatprep.subr.mxu0 0.0
    %190 = vmatpush1.msra.mxu0 0.0
    %191 = vmatprep.subr.mxu0 0.0
    %192 = vmatpush1.msra.mxu0 0.0
    %193 = vmatprep.subr.mxu0 0.0
    %194 = vmatpush1.msra.mxu0 0.0
    %195 = vmatprep.subr.mxu0 0.0
    %196 = vmatpush1.msra.mxu0 0.0
    %197 = vmatprep.subr.mxu0 0.0
    %198 = vmatpush1.msra.mxu0 0.0
    %199 = vmatprep.subr.mxu0 0.0
    %200 = vmatpush1.msra.mxu0 0.0
    %201 = vmatprep.subr.mxu0 0.0
    %202 = vmatpush1.msra.mxu0 0.0
    %203 = vmatprep.subr.mxu0 0.0
    %204 = vmatpush1.msra.mxu0 0.0
    %205 = vmatprep.subr.mxu0 0.0
    %206 = vmatpush1.msra.mxu0 0.0
    %207 = vmatprep.subr.mxu0 0.0
    %208 = vmatpush1.msra.mxu0 0.0
    %209 = vmatprep.subr.mxu0 0.0
    %210 = vmatpush1.msra.mxu0 0.0
    %211 = vmatprep.subr.mxu0 0.0
    %212 = vmatpush1.msra.mxu0 0.0
    %213 = vmatprep.subr.mxu0 0.0
    %214 = vmatpush1.msra.mxu0 0.0
    %215 = vmatprep.subr.mxu0 0.0
    %216 = vmatpush1.msra.mxu0 0.0
    %217 = vmatprep.subr.mxu0 0.0
    %218 = vmatpush1.msra.mxu0 0.0
    %219 = vmatprep.subr.mxu0 0.0
    %220 = vmatpush1.msra.mxu0 0.0
    %221 = vmatprep.mubr.f32.mxu0 0.0
    %222 = vmatmul.mubr.f32.gmra.mrb[0].mxu0 %v150
    %v223 = vpop.f32.mrb[0].mxu0
    %v224 = vadd.f32 0.0, %v223
    %v225 = vpop.f32.mrb[0].mxu0
    %v226 = vadd.f32 0.0, %v225
    %227 = vdwg.mxu0
    %228 = vmatprep.subr.mxu0 %v86
    %229 = vmatpush1.msra.mxu0 %v85
    %230 = vmatprep.subr.mxu0 %v90
    %231 = vmatpush1.msra.mxu0 %v89
    %232 = vmatprep.subr.mxu0 %v94
    %233 = vmatpush1.msra.mxu0 %v93
    %234 = vmatprep.subr.mxu0 %v98
    %235 = vmatpush1.msra.mxu0 %v97
    %236 = vmatprep.subr.mxu0 %v102
    %237 = vmatpush1.msra.mxu0 %v101
    %238 = vmatprep.subr.mxu0 %v106
    %239 = vmatpush1.msra.mxu0 %v105
    %240 = vmatprep.subr.mxu0 %v110
    %241 = vmatpush1.msra.mxu0 %v109
    %242 = vmatprep.subr.mxu0 %v114
    %243 = vmatpush1.msra.mxu0 %v113
    %244 = vmatprep.subr.mxu0 %v118
    %245 = vmatpush1.msra.mxu0 %v117
    %246 = vmatprep.subr.mxu0 %v122
    %247 = vmatpush1.msra.mxu0 %v121
    %248 = vmatprep.subr.mxu0 %v126
    %249 = vmatpush1.msra.mxu0 %v125
    %250 = vmatprep.subr.mxu0 %v130
    %251 = vmatpush1.msra.mxu0 %v129
    %252 = vmatprep.subr.mxu0 %v134
    %253 = vmatpush1.msra.mxu0 %v133
    %254 = vmatprep.subr.mxu0 %v138
    %255 = vmatpush1.msra.mxu0 %v137
    %256 = vmatprep.subr.mxu0 %v142
    %257 = vmatpush1.msra.mxu0 %v141
    %258 = vmatprep.subr.mxu0 %v146
    %259 = vmatpush1.msra.mxu0 %v145
    %260 = vmatprep.subr.mxu0 0.0
    %261 = vmatpush1.msra.mxu0 0.0
    %262 = vmatprep.subr.mxu0 0.0
    %263 = vmatpush1.msra.mxu0 0.0
    %264 = vmatprep.subr.mxu0 0.0
    %265 = vmatpush1.msra.mxu0 0.0
    %266 = vmatprep.subr.mxu0 0.0
    %267 = vmatpush1.msra.mxu0 0.0
    %268 = vmatprep.subr.mxu0 0.0
    %269 = vmatpush1.msra.mxu0 0.0
    %270 = vmatprep.subr.mxu0 0.0
    %271 = vmatpush1.msra.mxu0 0.0
    %272 = vmatprep.subr.mxu0 0.0
    %273 = vmatpush1.msra.mxu0 0.0
    %274 = vmatprep.subr.mxu0 0.0
    %275 = vmatpush1.msra.mxu0 0.0
    %276 = vmatprep.subr.mxu0 0.0
    %277 = vmatpush1.msra.mxu0 0.0
    %278 = vmatprep.subr.mxu0 0.0
    %279 = vmatpush1.msra.mxu0 0.0
    %280 = vmatprep.subr.mxu0 0.0
    %281 = vmatpush1.msra.mxu0 0.0
    %282 = vmatprep.subr.mxu0 0.0
    %283 = vmatpush1.msra.mxu0 0.0
    %284 = vmatprep.subr.mxu0 0.0
    %285 = vmatpush1.msra.mxu0 0.0
    %286 = vmatprep.subr.mxu0 0.0
    %287 = vmatpush1.msra.mxu0 0.0
    %288 = vmatprep.subr.mxu0 0.0
    %289 = vmatpush1.msra.mxu0 0.0
    %290 = vmatprep.subr.mxu0 0.0
    %291 = vmatpush1.msra.mxu0 0.0
    %292 = vmatprep.mubr.f32.mxu0 0.0
    %293 = vmatmul.mubr.f32.gmra.mrb[0].mxu0 %v150
    %v294 = vpop.f32.mrb[0].mxu0
    %v295 = vadd.f32 0.0, %v294
    %v296 = vpop.f32.mrb[0].mxu0
    %v297 = vadd.f32 0.0, %v296
    %298 = vdwg.mxu0
    %v299 = vadd.f32 %v153, %v224
    %v300 = vadd.f32 %v154, %v226
    %v301 = vadd.f32 %v155, %v295
    %v302 = vadd.f32 %v156, %v297
    %v303 = vxor.u32 %v299, 2147483648
    %v304 = vmul.f32 %v303, 1.442695
    %v305 = vpow.pop %v304
    %v306 = vadd.f32 %v305, 1.0
    %v307 = vrcp.pop %v306
    %v308 = vmul.f32 1.0, %v307
    %v309 = vxor.u32 %v300, 2147483648
    %v310 = vmul.f32 %v309, 1.442695
    %v311 = vpow.pop %v310
    %v312 = vadd.f32 %v311, 1.0
    %v313 = vrcp.pop %v312
    %v314 = vmul.f32 1.0, %v313
    %v315 = vtanh.pop %v301
    %v316 = vxor.u32 %v302, 2147483648
    %v317 = vmul.f32 %v316, 1.442695
    %v318 = vpow.pop %v317
    %v319 = vadd.f32 %v318, 1.0
    %v320 = vrcp.pop %v319
    %v321 = vmul.f32 1.0, %v320
    %v322 = vmul.f32 %v314, %v151
    %v323 = vmul.f32 %v308, %v315
    %v324 = vadd.f32 %v322, %v323
    %v325 = vtanh.pop %v324
    %v326 = vmul.f32 %v321, %v325
    %v327 = vstv %s149
    %vm328 = vcmp.eq.s32.totalorder %v148, %v327
    %v329 = vsel %vm328, 1, 0
    %330 = vset.pattern.permute.xlu0 0
    %331 = vperm.xlu0 %330, %v329
    %v332 = vpop.permute.xlu0 %331
    %vm333 = vcmp.eq.s32.totalorder %v332, 1
    %v334 = vsel %vm333, %v326, %v152
    %s335 = scalar_lea.vmem [#allocation9], 32
    %v336 = vld [vmem:[%s335] sm:$0xff]
    %v337 = vld [vmem:[%s335 + $0x8] sm:$0xff]
    %v338 = vld [vmem:[%s335 + $0x10] sm:$0xff]
    %v339 = vld [vmem:[%s335 + $0x18] sm:$0xff]
    %340 = vmatprep.subr.mxu0 %v84
    %341 = vmatpush1.msra.mxu0 %v83
    %342 = vmatprep.subr.mxu0 %v88
    %343 = vmatpush1.msra.mxu0 %v87
    %344 = vmatprep.subr.mxu0 %v92
    %345 = vmatpush1.msra.mxu0 %v91
    %346 = vmatprep.subr.mxu0 %v96
    %347 = vmatpush1.msra.mxu0 %v95
    %348 = vmatprep.subr.mxu0 %v100
    %349 = vmatpush1.msra.mxu0 %v99
    %350 = vmatprep.subr.mxu0 %v104
    %351 = vmatpush1.msra.mxu0 %v103
    %352 = vmatprep.subr.mxu0 %v108
    %353 = vmatpush1.msra.mxu0 %v107
    %354 = vmatprep.subr.mxu0 %v112
    %355 = vmatpush1.msra.mxu0 %v111
    %356 = vmatprep.subr.mxu0 %v116
    %357 = vmatpush1.msra.mxu0 %v115
    %358 = vmatprep.subr.mxu0 %v120
    %359 = vmatpush1.msra.mxu0 %v119
    %360 = vmatprep.subr.mxu0 %v124
    %361 = vmatpush1.msra.mxu0 %v123
    %362 = vmatprep.subr.mxu0 %v128
    %363 = vmatpush1.msra.mxu0 %v127
    %364 = vmatprep.subr.mxu0 %v132
    %365 = vmatpush1.msra.mxu0 %v131
    %366 = vmatprep.subr.mxu0 %v136
    %367 = vmatpush1.msra.mxu0 %v135
    %368 = vmatprep.subr.mxu0 %v140
    %369 = vmatpush1.msra.mxu0 %v139
    %370 = vmatprep.subr.mxu0 %v144
    %371 = vmatpush1.msra.mxu0 %v143
    %372 = vmatprep.subr.mxu0 0.0
    %373 = vmatpush1.msra.mxu0 0.0
    %374 = vmatprep.subr.mxu0 0.0
    %375 = vmatpush1.msra.mxu0 0.0
    %376 = vmatprep.subr.mxu0 0.0
    %377 = vmatpush1.msra.mxu0 0.0
    %378 = vmatprep.subr.mxu0 0.0
    %379 = vmatpush1.msra.mxu0 0.0
    %380 = vmatprep.subr.mxu0 0.0
    %381 = vmatpush1.msra.mxu0 0.0
    %382 = vmatprep.subr.mxu0 0.0
    %383 = vmatpush1.msra.mxu0 0.0
    %384 = vmatprep.subr.mxu0 0.0
    %385 = vmatpush1.msra.mxu0 0.0
    %386 = vmatprep.subr.mxu0 0.0
    %387 = vmatpush1.msra.mxu0 0.0
    %388 = vmatprep.subr.mxu0 0.0
    %389 = vmatpush1.msra.mxu0 0.0
    %390 = vmatprep.subr.mxu0 0.0
    %391 = vmatpush1.msra.mxu0 0.0
    %392 = vmatprep.subr.mxu0 0.0
    %393 = vmatpush1.msra.mxu0 0.0
    %394 = vmatprep.subr.mxu0 0.0
    %395 = vmatpush1.msra.mxu0 0.0
    %396 = vmatprep.subr.mxu0 0.0
    %397 = vmatpush1.msra.mxu0 0.0
    %398 = vmatprep.subr.mxu0 0.0
    %399 = vmatpush1.msra.mxu0 0.0
    %400 = vmatprep.subr.mxu0 0.0
    %401 = vmatpush1.msra.mxu0 0.0
    %402 = vmatprep.subr.mxu0 0.0
    %403 = vmatpush1.msra.mxu0 0.0
    %404 = vmatprep.mubr.f32.mxu0 0.0
    %405 = vmatmul.mubr.f32.gmra.mrb[0].mxu0 %v326
    %v406 = vpop.f32.mrb[0].mxu0
    %v407 = vadd.f32 0.0, %v406
    %v408 = vpop.f32.mrb[0].mxu0
    %v409 = vadd.f32 0.0, %v408
    %410 = vdwg.mxu0
    %411 = vmatprep.subr.mxu0 %v86
    %412 = vmatpush1.msra.mxu0 %v85
    %413 = vmatprep.subr.mxu0 %v90
    %414 = vmatpush1.msra.mxu0 %v89
    %415 = vmatprep.subr.mxu0 %v94
    %416 = vmatpush1.msra.mxu0 %v93
    %417 = vmatprep.subr.mxu0 %v98
    %418 = vmatpush1.msra.mxu0 %v97
    %419 = vmatprep.subr.mxu0 %v102
    %420 = vmatpush1.msra.mxu0 %v101
    %421 = vmatprep.subr.mxu0 %v106
    %422 = vmatpush1.msra.mxu0 %v105
    %423 = vmatprep.subr.mxu0 %v110
    %424 = vmatpush1.msra.mxu0 %v109
    %425 = vmatprep.subr.mxu0 %v114
    %426 = vmatpush1.msra.mxu0 %v113
    %427 = vmatprep.subr.mxu0 %v118
    %428 = vmatpush1.msra.mxu0 %v117
    %429 = vmatprep.subr.mxu0 %v122
    %430 = vmatpush1.msra.mxu0 %v121
    %431 = vmatprep.subr.mxu0 %v126
    %432 = vmatpush1.msra.mxu0 %v125
    %433 = vmatprep.subr.mxu0 %v130
    %434 = vmatpush1.msra.mxu0 %v129
    %435 = vmatprep.subr.mxu0 %v134
    %436 = vmatpush1.msra.mxu0 %v133
    %437 = vmatprep.subr.mxu0 %v138
    %438 = vmatpush1.msra.mxu0 %v137
    %439 = vmatprep.subr.mxu0 %v142
    %440 = vmatpush1.msra.mxu0 %v141
    %441 = vmatprep.subr.mxu0 %v146
    %442 = vmatpush1.msra.mxu0 %v145
    %443 = vmatprep.subr.mxu0 0.0
    %444 = vmatpush1.msra.mxu0 0.0
    %445 = vmatprep.subr.mxu0 0.0
    %446 = vmatpush1.msra.mxu0 0.0
    %447 = vmatprep.subr.mxu0 0.0
    %448 = vmatpush1.msra.mxu0 0.0
    %449 = vmatprep.subr.mxu0 0.0
    %450 = vmatpush1.msra.mxu0 0.0
    %451 = vmatprep.subr.mxu0 0.0
    %452 = vmatpush1.msra.mxu0 0.0
    %453 = vmatprep.subr.mxu0 0.0
    %454 = vmatpush1.msra.mxu0 0.0
    %455 = vmatprep.subr.mxu0 0.0
    %456 = vmatpush1.msra.mxu0 0.0
    %457 = vmatprep.subr.mxu0 0.0
    %458 = vmatpush1.msra.mxu0 0.0
    %459 = vmatprep.subr.mxu0 0.0
    %460 = vmatpush1.msra.mxu0 0.0
    %461 = vmatprep.subr.mxu0 0.0
    %462 = vmatpush1.msra.mxu0 0.0
    %463 = vmatprep.subr.mxu0 0.0
    %464 = vmatpush1.msra.mxu0 0.0
    %465 = vmatprep.subr.mxu0 0.0
    %466 = vmatpush1.msra.mxu0 0.0
    %467 = vmatprep.subr.mxu0 0.0
    %468 = vmatpush1.msra.mxu0 0.0
    %469 = vmatprep.subr.mxu0 0.0
    %470 = vmatpush1.msra.mxu0 0.0
    %471 = vmatprep.subr.mxu0 0.0
    %472 = vmatpush1.msra.mxu0 0.0
    %473 = vmatprep.subr.mxu0 0.0
    %474 = vmatpush1.msra.mxu0 0.0
    %475 = vmatprep.mubr.f32.mxu0 0.0
    %476 = vmatmul.mubr.f32.gmra.mrb[0].mxu0 %v326
    %v477 = vpop.f32.mrb[0].mxu0
    %v478 = vadd.f32 0.0, %v477
    %v479 = vpop.f32.mrb[0].mxu0
    %v480 = vadd.f32 0.0, %v479
    %481 = vdwg.mxu0
    %v482 = vadd.f32 %v336, %v407
    %v483 = vadd.f32 %v337, %v409
    %v484 = vadd.f32 %v338, %v478
    %v485 = vadd.f32 %v339, %v480
    %v486 = vxor.u32 %v482, 2147483648
    %v487 = vmul.f32 %v486, 1.442695
    %v488 = vpow.pop %v487
    %v489 = vadd.f32 %v488, 1.0
    %v490 = vrcp.pop %v489
    %v491 = vmul.f32 1.0, %v490
    %v492 = vxor.u32 %v483, 2147483648
    %v493 = vmul.f32 %v492, 1.442695
    %v494 = vpow.pop %v493
    %v495 = vadd.f32 %v494, 1.0
    %v496 = vrcp.pop %v495
    %v497 = vmul.f32 1.0, %v496
    %v498 = vtanh.pop %v484
    %v499 = vxor.u32 %v485, 2147483648
    %v500 = vmul.f32 %v499, 1.442695
    %v501 = vpow.pop %v500
    %v502 = vadd.f32 %v501, 1.0
    %v503 = vrcp.pop %v502
    %v504 = vmul.f32 1.0, %v503
    %v505 = vmul.f32 %v497, %v324
    %v506 = vmul.f32 %v491, %v498
    %v507 = vadd.f32 %v505, %v506
    %v508 = vtanh.pop %v507
    %v509 = vmul.f32 %v504, %v508
    %s510 = sadd.s32 %s149, 1
    %v511 = vstv %s510
    %vm512 = vcmp.eq.s32.totalorder %v148, %v511
    %v513 = vsel %vm512, 1, 0
    %514 = vset.pattern.permute.xlu0 0
    %515 = vperm.xlu0 %514, %v513
    %v516 = vpop.permute.xlu0 %515
    %vm517 = vcmp.eq.s32.totalorder %v516, 1
    %v518 = vsel %vm517, %v509, %v334
    %s519 = scalar_lea.vmem [#allocation9], 64
    %v520 = vld [vmem:[%s519] sm:$0xff]
    %v521 = vld [vmem:[%s519 + $0x8] sm:$0xff]
    %v522 = vld [vmem:[%s519 + $0x10] sm:$0xff]
    %v523 = vld [vmem:[%s519 + $0x18] sm:$0xff]
    %524 = vmatprep.subr.mxu0 %v84
    %525 = vmatpush1.msra.mxu0 %v83
    %526 = vmatprep.subr.mxu0 %v88
    %527 = vmatpush1.msra.mxu0 %v87
    %528 = vmatprep.subr.mxu0 %v92
    %529 = vmatpush1.msra.mxu0 %v91
    %530 = vmatprep.subr.mxu0 %v96
    %531 = vmatpush1.msra.mxu0 %v95
    %532 = vmatprep.subr.mxu0 %v100
    %533 = vmatpush1.msra.mxu0 %v99
    %534 = vmatprep.subr.mxu0 %v104
    %535 = vmatpush1.msra.mxu0 %v103
    %536 = vmatprep.subr.mxu0 %v108
    %537 = vmatpush1.msra.mxu0 %v107
    %538 = vmatprep.subr.mxu0 %v112
    %539 = vmatpush1.msra.mxu0 %v111
    %540 = vmatprep.subr.mxu0 %v116
    %541 = vmatpush1.msra.mxu0 %v115
    %542 = vmatprep.subr.mxu0 %v120
    %543 = vmatpush1.msra.mxu0 %v119
    %544 = vmatprep.subr.mxu0 %v124
    %545 = vmatpush1.msra.mxu0 %v123
    %546 = vmatprep.subr.mxu0 %v128
    %547 = vmatpush1.msra.mxu0 %v127
    %548 = vmatprep.subr.mxu0 %v132
    %549 = vmatpush1.msra.mxu0 %v131
    %550 = vmatprep.subr.mxu0 %v136
    %551 = vmatpush1.msra.mxu0 %v135
    %552 = vmatprep.subr.mxu0 %v140
    %553 = vmatpush1.msra.mxu0 %v139
    %554 = vmatprep.subr.mxu0 %v144
    %555 = vmatpush1.msra.mxu0 %v143
    %556 = vmatprep.subr.mxu0 0.0
    %557 = vmatpush1.msra.mxu0 0.0
    %558 = vmatprep.subr.mxu0 0.0
    %559 = vmatpush1.msra.mxu0 0.0
    %560 = vmatprep.subr.mxu0 0.0
    %561 = vmatpush1.msra.mxu0 0.0
    %562 = vmatprep.subr.mxu0 0.0
    %563 = vmatpush1.msra.mxu0 0.0
    %564 = vmatprep.subr.mxu0 0.0
    %565 = vmatpush1.msra.mxu0 0.0
    %566 = vmatprep.subr.mxu0 0.0
    %567 = vmatpush1.msra.mxu0 0.0
    %568 = vmatprep.subr.mxu0 0.0
    %569 = vmatpush1.msra.mxu0 0.0
    %570 = vmatprep.subr.mxu0 0.0
    %571 = vmatpush1.msra.mxu0 0.0
    %572 = vmatprep.subr.mxu0 0.0
    %573 = vmatpush1.msra.mxu0 0.0
    %574 = vmatprep.subr.mxu0 0.0
    %575 = vmatpush1.msra.mxu0 0.0
    %576 = vmatprep.subr.mxu0 0.0
    %577 = vmatpush1.msra.mxu0 0.0
    %578 = vmatprep.subr.mxu0 0.0
    %579 = vmatpush1.msra.mxu0 0.0
    %580 = vmatprep.subr.mxu0 0.0
    %581 = vmatpush1.msra.mxu0 0.0
    %582 = vmatprep.subr.mxu0 0.0
    %583 = vmatpush1.msra.mxu0 0.0
    %584 = vmatprep.subr.mxu0 0.0
    %585 = vmatpush1.msra.mxu0 0.0
    %586 = vmatprep.subr.mxu0 0.0
    %587 = vmatpush1.msra.mxu0 0.0
    %588 = vmatprep.mubr.f32.mxu0 0.0
    %589 = vmatmul.mubr.f32.gmra.mrb[0].mxu0 %v509
    %v590 = vpop.f32.mrb[0].mxu0
    %v591 = vadd.f32 0.0, %v590
    %v592 = vpop.f32.mrb[0].mxu0
    %v593 = vadd.f32 0.0, %v592
    %594 = vdwg.mxu0
    %595 = vmatprep.subr.mxu0 %v86
    %596 = vmatpush1.msra.mxu0 %v85
    %597 = vmatprep.subr.mxu0 %v90
    %598 = vmatpush1.msra.mxu0 %v89
    %599 = vmatprep.subr.mxu0 %v94
    %600 = vmatpush1.msra.mxu0 %v93
    %601 = vmatprep.subr.mxu0 %v98
    %602 = vmatpush1.msra.mxu0 %v97
    %603 = vmatprep.subr.mxu0 %v102
    %604 = vmatpush1.msra.mxu0 %v101
    %605 = vmatprep.subr.mxu0 %v106
    %606 = vmatpush1.msra.mxu0 %v105
    %607 = vmatprep.subr.mxu0 %v110
    %608 = vmatpush1.msra.mxu0 %v109
    %609 = vmatprep.subr.mxu0 %v114
    %610 = vmatpush1.msra.mxu0 %v113
    %611 = vmatprep.subr.mxu0 %v118
    %612 = vmatpush1.msra.mxu0 %v117
    %613 = vmatprep.subr.mxu0 %v122
    %614 = vmatpush1.msra.mxu0 %v121
    %615 = vmatprep.subr.mxu0 %v126
    %616 = vmatpush1.msra.mxu0 %v125
    %617 = vmatprep.subr.mxu0 %v130
    %618 = vmatpush1.msra.mxu0 %v129
    %619 = vmatprep.subr.mxu0 %v134
    %620 = vmatpush1.msra.mxu0 %v133
    %621 = vmatprep.subr.mxu0 %v138
    %622 = vmatpush1.msra.mxu0 %v137
    %623 = vmatprep.subr.mxu0 %v142
    %624 = vmatpush1.msra.mxu0 %v141
    %625 = vmatprep.subr.mxu0 %v146
    %626 = vmatpush1.msra.mxu0 %v145
    %627 = vmatprep.subr.mxu0 0.0
    %628 = vmatpush1.msra.mxu0 0.0
    %629 = vmatprep.subr.mxu0 0.0
    %630 = vmatpush1.msra.mxu0 0.0
    %631 = vmatprep.subr.mxu0 0.0
    %632 = vmatpush1.msra.mxu0 0.0
    %633 = vmatprep.subr.mxu0 0.0
    %634 = vmatpush1.msra.mxu0 0.0
    %635 = vmatprep.subr.mxu0 0.0
    %636 = vmatpush1.msra.mxu0 0.0
    %637 = vmatprep.subr.mxu0 0.0
    %638 = vmatpush1.msra.mxu0 0.0
    %639 = vmatprep.subr.mxu0 0.0
    %640 = vmatpush1.msra.mxu0 0.0
    %641 = vmatprep.subr.mxu0 0.0
    %642 = vmatpush1.msra.mxu0 0.0
    %643 = vmatprep.subr.mxu0 0.0
    %644 = vmatpush1.msra.mxu0 0.0
    %645 = vmatprep.subr.mxu0 0.0
    %646 = vmatpush1.msra.mxu0 0.0
    %647 = vmatprep.subr.mxu0 0.0
    %648 = vmatpush1.msra.mxu0 0.0
    %649 = vmatprep.subr.mxu0 0.0
    %650 = vmatpush1.msra.mxu0 0.0
    %651 = vmatprep.subr.mxu0 0.0
    %652 = vmatpush1.msra.mxu0 0.0
    %653 = vmatprep.subr.mxu0 0.0
    %654 = vmatpush1.msra.mxu0 0.0
    %655 = vmatprep.subr.mxu0 0.0
    %656 = vmatpush1.msra.mxu0 0.0
    %657 = vmatprep.subr.mxu0 0.0
    %658 = vmatpush1.msra.mxu0 0.0
    %659 = vmatprep.mubr.f32.mxu0 0.0
    %660 = vmatmul.mubr.f32.gmra.mrb[0].mxu0 %v509
    %v661 = vpop.f32.mrb[0].mxu0
    %v662 = vadd.f32 0.0, %v661
    %v663 = vpop.f32.mrb[0].mxu0
    %v664 = vadd.f32 0.0, %v663
    %665 = vdwg.mxu0
    %v666 = vadd.f32 %v520, %v591
    %v667 = vadd.f32 %v521, %v593
    %v668 = vadd.f32 %v522, %v662
    %v669 = vadd.f32 %v523, %v664
    %v670 = vxor.u32 %v666, 2147483648
    %v671 = vmul.f32 %v670, 1.442695
    %v672 = vpow.pop %v671
    %v673 = vadd.f32 %v672, 1.0
    %v674 = vrcp.pop %v673
    %v675 = vmul.f32 1.0, %v674
    %v676 = vxor.u32 %v667, 2147483648
    %v677 = vmul.f32 %v676, 1.442695
    %v678 = vpow.pop %v677
    %v679 = vadd.f32 %v678, 1.0
    %v680 = vrcp.pop %v679
    %v681 = vmul.f32 1.0, %v680
    %v682 = vtanh.pop %v668
    %v683 = vxor.u32 %v669, 2147483648
    %v684 = vmul.f32 %v683, 1.442695
    %v685 = vpow.pop %v684
    %v686 = vadd.f32 %v685, 1.0
    %v687 = vrcp.pop %v686
    %v688 = vmul.f32 1.0, %v687
    %v689 = vmul.f32 %v681, %v507
    %v690 = vmul.f32 %v675, %v682
    %v691 = vadd.f32 %v689, %v690
    %v692 = vtanh.pop %v691
    %v693 = vmul.f32 %v688, %v692
    %s694 = sadd.s32 %s149, 2
    %v695 = vstv %s694
    %vm696 = vcmp.eq.s32.totalorder %v148, %v695
    %v697 = vsel %vm696, 1, 0
    %698 = vset.pattern.permute.xlu0 0
    %699 = vperm.xlu0 %698, %v697
    %v700 = vpop.permute.xlu0 %699
    %vm701 = vcmp.eq.s32.totalorder %v700, 1
    %v702 = vsel %vm701, %v693, %v518
    %s703 = scalar_lea.vmem [#allocation9], 96
    %v704 = vld [vmem:[%s703] sm:$0xff]
    %v705 = vld [vmem:[%s703 + $0x8] sm:$0xff]
    %v706 = vld [vmem:[%s703 + $0x10] sm:$0xff]
    %v707 = vld [vmem:[%s703 + $0x18] sm:$0xff]
    %708 = vmatprep.subr.mxu0 %v84
    %709 = vmatpush1.msra.mxu0 %v83
    %710 = vmatprep.subr.mxu0 %v88
    %711 = vmatpush1.msra.mxu0 %v87
    %712 = vmatprep.subr.mxu0 %v92
    %713 = vmatpush1.msra.mxu0 %v91
    %714 = vmatprep.subr.mxu0 %v96
    %715 = vmatpush1.msra.mxu0 %v95
    %716 = vmatprep.subr.mxu0 %v100
    %717 = vmatpush1.msra.mxu0 %v99
    %718 = vmatprep.subr.mxu0 %v104
    %719 = vmatpush1.msra.mxu0 %v103
    %720 = vmatprep.subr.mxu0 %v108
    %721 = vmatpush1.msra.mxu0 %v107
    %722 = vmatprep.subr.mxu0 %v112
    %723 = vmatpush1.msra.mxu0 %v111
    %724 = vmatprep.subr.mxu0 %v116
    %725 = vmatpush1.msra.mxu0 %v115
    %726 = vmatprep.subr.mxu0 %v120
    %727 = vmatpush1.msra.mxu0 %v119
    %728 = vmatprep.subr.mxu0 %v124
    %729 = vmatpush1.msra.mxu0 %v123
    %730 = vmatprep.subr.mxu0 %v128
    %731 = vmatpush1.msra.mxu0 %v127
    %732 = vmatprep.subr.mxu0 %v132
    %733 = vmatpush1.msra.mxu0 %v131
    %734 = vmatprep.subr.mxu0 %v136
    %735 = vmatpush1.msra.mxu0 %v135
    %736 = vmatprep.subr.mxu0 %v140
    %737 = vmatpush1.msra.mxu0 %v139
    %738 = vmatprep.subr.mxu0 %v144
    %739 = vmatpush1.msra.mxu0 %v143
    %740 = vmatprep.subr.mxu0 0.0
    %741 = vmatpush1.msra.mxu0 0.0
    %742 = vmatprep.subr.mxu0 0.0
    %743 = vmatpush1.msra.mxu0 0.0
    %744 = vmatprep.subr.mxu0 0.0
    %745 = vmatpush1.msra.mxu0 0.0
    %746 = vmatprep.subr.mxu0 0.0
    %747 = vmatpush1.msra.mxu0 0.0
    %748 = vmatprep.subr.mxu0 0.0
    %749 = vmatpush1.msra.mxu0 0.0
    %750 = vmatprep.subr.mxu0 0.0
    %751 = vmatpush1.msra.mxu0 0.0
    %752 = vmatprep.subr.mxu0 0.0
    %753 = vmatpush1.msra.mxu0 0.0
    %754 = vmatprep.subr.mxu0 0.0
    %755 = vmatpush1.msra.mxu0 0.0
    %756 = vmatprep.subr.mxu0 0.0
    %757 = vmatpush1.msra.mxu0 0.0
    %758 = vmatprep.subr.mxu0 0.0
    %759 = vmatpush1.msra.mxu0 0.0
    %760 = vmatprep.subr.mxu0 0.0
    %761 = vmatpush1.msra.mxu0 0.0
    %762 = vmatprep.subr.mxu0 0.0
    %763 = vmatpush1.msra.mxu0 0.0
    %764 = vmatprep.subr.mxu0 0.0
    %765 = vmatpush1.msra.mxu0 0.0
    %766 = vmatprep.subr.mxu0 0.0
    %767 = vmatpush1.msra.mxu0 0.0
    %768 = vmatprep.subr.mxu0 0.0
    %769 = vmatpush1.msra.mxu0 0.0
    %770 = vmatprep.subr.mxu0 0.0
    %771 = vmatpush1.msra.mxu0 0.0
    %772 = vmatprep.mubr.f32.mxu0 0.0
    %773 = vmatmul.mubr.f32.gmra.mrb[0].mxu0 %v693
    %v774 = vpop.f32.mrb[0].mxu0
    %v775 = vadd.f32 0.0, %v774
    %v776 = vpop.f32.mrb[0].mxu0
    %v777 = vadd.f32 0.0, %v776
    %778 = vdwg.mxu0
    %779 = vmatprep.subr.mxu0 %v86
    %780 = vmatpush1.msra.mxu0 %v85
    %781 = vmatprep.subr.mxu0 %v90
    %782 = vmatpush1.msra.mxu0 %v89
    %783 = vmatprep.subr.mxu0 %v94
    %784 = vmatpush1.msra.mxu0 %v93
    %785 = vmatprep.subr.mxu0 %v98
    %786 = vmatpush1.msra.mxu0 %v97
    %787 = vmatprep.subr.mxu0 %v102
    %788 = vmatpush1.msra.mxu0 %v101
    %789 = vmatprep.subr.mxu0 %v106
    %790 = vmatpush1.msra.mxu0 %v105
    %791 = vmatprep.subr.mxu0 %v110
    %792 = vmatpush1.msra.mxu0 %v109
    %793 = vmatprep.subr.mxu0 %v114
    %794 = vmatpush1.msra.mxu0 %v113
    %795 = vmatprep.subr.mxu0 %v118
    %796 = vmatpush1.msra.mxu0 %v117
    %797 = vmatprep.subr.mxu0 %v122
    %798 = vmatpush1.msra.mxu0 %v121
    %799 = vmatprep.subr.mxu0 %v126
    %800 = vmatpush1.msra.mxu0 %v125
    %801 = vmatprep.subr.mxu0 %v130
    %802 = vmatpush1.msra.mxu0 %v129
    %803 = vmatprep.subr.mxu0 %v134
    %804 = vmatpush1.msra.mxu0 %v133
    %805 = vmatprep.subr.mxu0 %v138
    %806 = vmatpush1.msra.mxu0 %v137
    %807 = vmatprep.subr.mxu0 %v142
    %808 = vmatpush1.msra.mxu0 %v141
    %809 = vmatprep.subr.mxu0 %v146
    %810 = vmatpush1.msra.mxu0 %v145
    %811 = vmatprep.subr.mxu0 0.0
    %812 = vmatpush1.msra.mxu0 0.0
    %813 = vmatprep.subr.mxu0 0.0
    %814 = vmatpush1.msra.mxu0 0.0
    %815 = vmatprep.subr.mxu0 0.0
    %816 = vmatpush1.msra.mxu0 0.0
    %817 = vmatprep.subr.mxu0 0.0
    %818 = vmatpush1.msra.mxu0 0.0
    %819 = vmatprep.subr.mxu0 0.0
    %820 = vmatpush1.msra.mxu0 0.0
    %821 = vmatprep.subr.mxu0 0.0
    %822 = vmatpush1.msra.mxu0 0.0
    %823 = vmatprep.subr.mxu0 0.0
    %824 = vmatpush1.msra.mxu0 0.0
    %825 = vmatprep.subr.mxu0 0.0
    %826 = vmatpush1.msra.mxu0 0.0
    %827 = vmatprep.subr.mxu0 0.0
    %828 = vmatpush1.msra.mxu0 0.0
    %829 = vmatprep.subr.mxu0 0.0
    %830 = vmatpush1.msra.mxu0 0.0
    %831 = vmatprep.subr.mxu0 0.0
    %832 = vmatpush1.msra.mxu0 0.0
    %833 = vmatprep.subr.mxu0 0.0
    %834 = vmatpush1.msra.mxu0 0.0
    %835 = vmatprep.subr.mxu0 0.0
    %836 = vmatpush1.msra.mxu0 0.0
    %837 = vmatprep.subr.mxu0 0.0
    %838 = vmatpush1.msra.mxu0 0.0
    %839 = vmatprep.subr.mxu0 0.0
    %840 = vmatpush1.msra.mxu0 0.0
    %841 = vmatprep.subr.mxu0 0.0
    %842 = vmatpush1.msra.mxu0 0.0
    %843 = vmatprep.mubr.f32.mxu0 0.0
    %844 = vmatmul.mubr.f32.gmra.mrb[0].mxu0 %v693
    %v845 = vpop.f32.mrb[0].mxu0
    %v846 = vadd.f32 0.0, %v845
    %v847 = vpop.f32.mrb[0].mxu0
    %v848 = vadd.f32 0.0, %v847
    %849 = vdwg.mxu0
    %v850 = vadd.f32 %v704, %v775
    %v851 = vadd.f32 %v705, %v777
    %v852 = vadd.f32 %v706, %v846
    %v853 = vadd.f32 %v707, %v848
    %v854 = vxor.u32 %v850, 2147483648
    %v855 = vmul.f32 %v854, 1.442695
    %v856 = vpow.pop %v855
    %v857 = vadd.f32 %v856, 1.0
    %v858 = vrcp.pop %v857
    %v859 = vmul.f32 1.0, %v858
    %v860 = vxor.u32 %v851, 2147483648
    %v861 = vmul.f32 %v860, 1.442695
    %v862 = vpow.pop %v861
    %v863 = vadd.f32 %v862, 1.0
    %v864 = vrcp.pop %v863
    %v865 = vmul.f32 1.0, %v864
    %v866 = vtanh.pop %v852
    %v867 = vxor.u32 %v853, 2147483648
    %v868 = vmul.f32 %v867, 1.442695
    %v869 = vpow.pop %v868
    %v870 = vadd.f32 %v869, 1.0
    %v871 = vrcp.pop %v870
    %v872 = vmul.f32 1.0, %v871
    %v873 = vmul.f32 %v865, %v691
    %v874 = vmul.f32 %v859, %v866
    %v875 = vadd.f32 %v873, %v874
    %v876 = vtanh.pop %v875
    %v877 = vmul.f32 %v872, %v876
    %s878 = sadd.s32 %s149, 3
    %v879 = vstv %s878
    %vm880 = vcmp.eq.s32.totalorder %v148, %v879
    %v881 = vsel %vm880, 1, 0
    %882 = vset.pattern.permute.xlu0 0
    %883 = vperm.xlu0 %882, %v881
    %v884 = vpop.permute.xlu0 %883
    %vm885 = vcmp.eq.s32.totalorder %v884, 1
    %v886 = vsel %vm885, %v877, %v702
    %s887 = scalar_lea.vmem [#allocation9], 128
    %v888 = vld [vmem:[%s887] sm:$0xff]
    %v889 = vld [vmem:[%s887 + $0x8] sm:$0xff]
    %v890 = vld [vmem:[%s887 + $0x10] sm:$0xff]
    %v891 = vld [vmem:[%s887 + $0x18] sm:$0xff]
    %892 = vmatprep.subr.mxu0 %v84
    %893 = vmatpush1.msra.mxu0 %v83
    %894 = vmatprep.subr.mxu0 %v88
    %895 = vmatpush1.msra.mxu0 %v87
    %896 = vmatprep.subr.mxu0 %v92
    %897 = vmatpush1.msra.mxu0 %v91
    %898 = vmatprep.subr.mxu0 %v96
    %899 = vmatpush1.msra.mxu0 %v95
    %900 = vmatprep.subr.mxu0 %v100
    %901 = vmatpush1.msra.mxu0 %v99
    %902 = vmatprep.subr.mxu0 %v104
    %903 = vmatpush1.msra.mxu0 %v103
    %904 = vmatprep.subr.mxu0 %v108
    %905 = vmatpush1.msra.mxu0 %v107
    %906 = vmatprep.subr.mxu0 %v112
    %907 = vmatpush1.msra.mxu0 %v111
    %908 = vmatprep.subr.mxu0 %v116
    %909 = vmatpush1.msra.mxu0 %v115
    %910 = vmatprep.subr.mxu0 %v120
    %911 = vmatpush1.msra.mxu0 %v119
    %912 = vmatprep.subr.mxu0 %v124
    %913 = vmatpush1.msra.mxu0 %v123
    %914 = vmatprep.subr.mxu0 %v128
    %915 = vmatpush1.msra.mxu0 %v127
    %916 = vmatprep.subr.mxu0 %v132
    %917 = vmatpush1.msra.mxu0 %v131
    %918 = vmatprep.subr.mxu0 %v136
    %919 = vmatpush1.msra.mxu0 %v135
    %920 = vmatprep.subr.mxu0 %v140
    %921 = vmatpush1.msra.mxu0 %v139
    %922 = vmatprep.subr.mxu0 %v144
    %923 = vmatpush1.msra.mxu0 %v143
    %924 = vmatprep.subr.mxu0 0.0
    %925 = vmatpush1.msra.mxu0 0.0
    %926 = vmatprep.subr.mxu0 0.0
    %927 = vmatpush1.msra.mxu0 0.0
    %928 = vmatprep.subr.mxu0 0.0
    %929 = vmatpush1.msra.mxu0 0.0
    %930 = vmatprep.subr.mxu0 0.0
    %931 = vmatpush1.msra.mxu0 0.0
    %932 = vmatprep.subr.mxu0 0.0
    %933 = vmatpush1.msra.mxu0 0.0
    %934 = vmatprep.subr.mxu0 0.0
    %935 = vmatpush1.msra.mxu0 0.0
    %936 = vmatprep.subr.mxu0 0.0
    %937 = vmatpush1.msra.mxu0 0.0
    %938 = vmatprep.subr.mxu0 0.0
    %939 = vmatpush1.msra.mxu0 0.0
    %940 = vmatprep.subr.mxu0 0.0
    %941 = vmatpush1.msra.mxu0 0.0
    %942 = vmatprep.subr.mxu0 0.0
    %943 = vmatpush1.msra.mxu0 0.0
    %944 = vmatprep.subr.mxu0 0.0
    %945 = vmatpush1.msra.mxu0 0.0
    %946 = vmatprep.subr.mxu0 0.0
    %947 = vmatpush1.msra.mxu0 0.0
    %948 = vmatprep.subr.mxu0 0.0
    %949 = vmatpush1.msra.mxu0 0.0
    %950 = vmatprep.subr.mxu0 0.0
    %951 = vmatpush1.msra.mxu0 0.0
    %952 = vmatprep.subr.mxu0 0.0
    %953 = vmatpush1.msra.mxu0 0.0
    %954 = vmatprep.subr.mxu0 0.0
    %955 = vmatpush1.msra.mxu0 0.0
    %956 = vmatprep.mubr.f32.mxu0 0.0
    %957 = vmatmul.mubr.f32.gmra.mrb[0].mxu0 %v877
    %v958 = vpop.f32.mrb[0].mxu0
    %v959 = vadd.f32 0.0, %v958
    %v960 = vpop.f32.mrb[0].mxu0
    %v961 = vadd.f32 0.0, %v960
    %962 = vdwg.mxu0
    %963 = vmatprep.subr.mxu0 %v86
    %964 = vmatpush1.msra.mxu0 %v85
    %965 = vmatprep.subr.mxu0 %v90
    %966 = vmatpush1.msra.mxu0 %v89
    %967 = vmatprep.subr.mxu0 %v94
    %968 = vmatpush1.msra.mxu0 %v93
    %969 = vmatprep.subr.mxu0 %v98
    %970 = vmatpush1.msra.mxu0 %v97
    %971 = vmatprep.subr.mxu0 %v102
    %972 = vmatpush1.msra.mxu0 %v101
    %973 = vmatprep.subr.mxu0 %v106
    %974 = vmatpush1.msra.mxu0 %v105
    %975 = vmatprep.subr.mxu0 %v110
    %976 = vmatpush1.msra.mxu0 %v109
    %977 = vmatprep.subr.mxu0 %v114
    %978 = vmatpush1.msra.mxu0 %v113
    %979 = vmatprep.subr.mxu0 %v118
    %980 = vmatpush1.msra.mxu0 %v117
    %981 = vmatprep.subr.mxu0 %v122
    %982 = vmatpush1.msra.mxu0 %v121
    %983 = vmatprep.subr.mxu0 %v126
    %984 = vmatpush1.msra.mxu0 %v125
    %985 = vmatprep.subr.mxu0 %v130
    %986 = vmatpush1.msra.mxu0 %v129
    %987 = vmatprep.subr.mxu0 %v134
    %988 = vmatpush1.msra.mxu0 %v133
    %989 = vmatprep.subr.mxu0 %v138
    %990 = vmatpush1.msra.mxu0 %v137
    %991 = vmatprep.subr.mxu0 %v142
    %992 = vmatpush1.msra.mxu0 %v141
    %993 = vmatprep.subr.mxu0 %v146
    %994 = vmatpush1.msra.mxu0 %v145
    %995 = vmatprep.subr.mxu0 0.0
    %996 = vmatpush1.msra.mxu0 0.0
    %997 = vmatprep.subr.mxu0 0.0
    %998 = vmatpush1.msra.mxu0 0.0
    %999 = vmatprep.subr.mxu0 0.0
    %1000 = vmatpush1.msra.mxu0 0.0
    %1001 = vmatprep.subr.mxu0 0.0
    %1002 = vmatpush1.msra.mxu0 0.0
    %1003 = vmatprep.subr.mxu0 0.0
    %1004 = vmatpush1.msra.mxu0 0.0
    %1005 = vmatprep.subr.mxu0 0.0
    %1006 = vmatpush1.msra.mxu0 0.0
    %1007 = vmatprep.subr.mxu0 0.0
    %1008 = vmatpush1.msra.mxu0 0.0
    %1009 = vmatprep.subr.mxu0 0.0
    %1010 = vmatpush1.msra.mxu0 0.0
    %1011 = vmatprep.subr.mxu0 0.0
    %1012 = vmatpush1.msra.mxu0 0.0
    %1013 = vmatprep.subr.mxu0 0.0
    %1014 = vmatpush1.msra.mxu0 0.0
    %1015 = vmatprep.subr.mxu0 0.0
    %1016 = vmatpush1.msra.mxu0 0.0
    %1017 = vmatprep.subr.mxu0 0.0
    %1018 = vmatpush1.msra.mxu0 0.0
    %1019 = vmatprep.subr.mxu0 0.0
    %1020 = vmatpush1.msra.mxu0 0.0
    %1021 = vmatprep.subr.mxu0 0.0
    %1022 = vmatpush1.msra.mxu0 0.0
    %1023 = vmatprep.subr.mxu0 0.0
    %1024 = vmatpush1.msra.mxu0 0.0
    %1025 = vmatprep.subr.mxu0 0.0
    %1026 = vmatpush1.msra.mxu0 0.0
    %1027 = vmatprep.mubr.f32.mxu0 0.0
    %1028 = vmatmul.mubr.f32.gmra.mrb[0].mxu0 %v877
    %v1029 = vpop.f32.mrb[0].mxu0
    %v1030 = vadd.f32 0.0, %v1029
    %v1031 = vpop.f32.mrb[0].mxu0
    %v1032 = vadd.f32 0.0, %v1031
    %1033 = vdwg.mxu0
    %v1034 = vadd.f32 %v888, %v959
    %v1035 = vadd.f32 %v889, %v961
    %v1036 = vadd.f32 %v890, %v1030
    %v1037 = vadd.f32 %v891, %v1032
    %v1038 = vxor.u32 %v1034, 2147483648
    %v1039 = vmul.f32 %v1038, 1.442695
    %v1040 = vpow.pop %v1039
    %v1041 = vadd.f32 %v1040, 1.0
    %v1042 = vrcp.pop %v1041
    %v1043 = vmul.f32 1.0, %v1042
    %v1044 = vxor.u32 %v1035, 2147483648
    %v1045 = vmul.f32 %v1044, 1.442695
    %v1046 = vpow.pop %v1045
    %v1047 = vadd.f32 %v1046, 1.0
    %v1048 = vrcp.pop %v1047
    %v1049 = vmul.f32 1.0, %v1048
    %v1050 = vtanh.pop %v1036
    %v1051 = vxor.u32 %v1037, 2147483648
    %v1052 = vmul.f32 %v1051, 1.442695
    %v1053 = vpow.pop %v1052
    %v1054 = vadd.f32 %v1053, 1.0
    %v1055 = vrcp.pop %v1054
    %v1056 = vmul.f32 1.0, %v1055
    %v1057 = vmul.f32 %v1049, %v875
    %v1058 = vmul.f32 %v1043, %v1050
    %v1059 = vadd.f32 %v1057, %v1058
    %v1060 = vtanh.pop %v1059
    %v1061 = vmul.f32 %v1056, %v1060
    %s1062 = sadd.s32 %s149, 4
    %v1063 = vstv %s1062
    %vm1064 = vcmp.eq.s32.totalorder %v148, %v1063
    %v1065 = vsel %vm1064, 1, 0
    %1066 = vset.pattern.permute.xlu0 0
    %1067 = vperm.xlu0 %1066, %v1065
    %v1068 = vpop.permute.xlu0 %1067
    %vm1069 = vcmp.eq.s32.totalorder %v1068, 1
    %v1070 = vsel %vm1069, %v1061, %v886
    %s1071 = scalar_lea.vmem [#allocation9], 160
    %v1072 = vld [vmem:[%s1071] sm:$0xff]
    %v1073 = vld [vmem:[%s1071 + $0x8] sm:$0xff]
    %v1074 = vld [vmem:[%s1071 + $0x10] sm:$0xff]
    %v1075 = vld [vmem:[%s1071 + $0x18] sm:$0xff]
    %1076 = vmatprep.subr.mxu0 %v84
    %1077 = vmatpush1.msra.mxu0 %v83
    %1078 = vmatprep.subr.mxu0 %v88
    %1079 = vmatpush1.msra.mxu0 %v87
    %1080 = vmatprep.subr.mxu0 %v92
    %1081 = vmatpush1.msra.mxu0 %v91
    %1082 = vmatprep.subr.mxu0 %v96
    %1083 = vmatpush1.msra.mxu0 %v95
    %1084 = vmatprep.subr.mxu0 %v100
    %1085 = vmatpush1.msra.mxu0 %v99
    %1086 = vmatprep.subr.mxu0 %v104
    %1087 = vmatpush1.msra.mxu0 %v103
    %1088 = vmatprep.subr.mxu0 %v108
    %1089 = vmatpush1.msra.mxu0 %v107
    %1090 = vmatprep.subr.mxu0 %v112
    %1091 = vmatpush1.msra.mxu0 %v111
    %1092 = vmatprep.subr.mxu0 %v116
    %1093 = vmatpush1.msra.mxu0 %v115
    %1094 = vmatprep.subr.mxu0 %v120
    %1095 = vmatpush1.msra.mxu0 %v119
    %1096 = vmatprep.subr.mxu0 %v124
    %1097 = vmatpush1.msra.mxu0 %v123
    %1098 = vmatprep.subr.mxu0 %v128
    %1099 = vmatpush1.msra.mxu0 %v127
    %1100 = vmatprep.subr.mxu0 %v132
    %1101 = vmatpush1.msra.mxu0 %v131
    %1102 = vmatprep.subr.mxu0 %v136
    %1103 = vmatpush1.msra.mxu0 %v135
    %1104 = vmatprep.subr.mxu0 %v140
    %1105 = vmatpush1.msra.mxu0 %v139
    %1106 = vmatprep.subr.mxu0 %v144
    %1107 = vmatpush1.msra.mxu0 %v143
    %1108 = vmatprep.subr.mxu0 0.0
    %1109 = vmatpush1.msra.mxu0 0.0
    %1110 = vmatprep.subr.mxu0 0.0
    %1111 = vmatpush1.msra.mxu0 0.0
    %1112 = vmatprep.subr.mxu0 0.0
    %1113 = vmatpush1.msra.mxu0 0.0
    %1114 = vmatprep.subr.mxu0 0.0
    %1115 = vmatpush1.msra.mxu0 0.0
    %1116 = vmatprep.subr.mxu0 0.0
    %1117 = vmatpush1.msra.mxu0 0.0
    %1118 = vmatprep.subr.mxu0 0.0
    %1119 = vmatpush1.msra.mxu0 0.0
    %1120 = vmatprep.subr.mxu0 0.0
    %1121 = vmatpush1.msra.mxu0 0.0
    %1122 = vmatprep.subr.mxu0 0.0
    %1123 = vmatpush1.msra.mxu0 0.0
    %1124 = vmatprep.subr.mxu0 0.0
    %1125 = vmatpush1.msra.mxu0 0.0
    %1126 = vmatprep.subr.mxu0 0.0
    %1127 = vmatpush1.msra.mxu0 0.0
    %1128 = vmatprep.subr.mxu0 0.0
    %1129 = vmatpush1.msra.mxu0 0.0
    %1130 = vmatprep.subr.mxu0 0.0
    %1131 = vmatpush1.msra.mxu0 0.0
    %1132 = vmatprep.subr.mxu0 0.0
    %1133 = vmatpush1.msra.mxu0 0.0
    %1134 = vmatprep.subr.mxu0 0.0
    %1135 = vmatpush1.msra.mxu0 0.0
    %1136 = vmatprep.subr.mxu0 0.0
    %1137 = vmatpush1.msra.mxu0 0.0
    %1138 = vmatprep.subr.mxu0 0.0
    %1139 = vmatpush1.msra.mxu0 0.0
    %1140 = vmatprep.mubr.f32.mxu0 0.0
    %1141 = vmatmul.mubr.f32.gmra.mrb[0].mxu0 %v1061
    %v1142 = vpop.f32.mrb[0].mxu0
    %v1143 = vadd.f32 0.0, %v1142
    %v1144 = vpop.f32.mrb[0].mxu0
    %v1145 = vadd.f32 0.0, %v1144
    %1146 = vdwg.mxu0
    %1147 = vmatprep.subr.mxu0 %v86
    %1148 = vmatpush1.msra.mxu0 %v85
    %1149 = vmatprep.subr.mxu0 %v90
    %1150 = vmatpush1.msra.mxu0 %v89
    %1151 = vmatprep.subr.mxu0 %v94
    %1152 = vmatpush1.msra.mxu0 %v93
    %1153 = vmatprep.subr.mxu0 %v98
    %1154 = vmatpush1.msra.mxu0 %v97
    %1155 = vmatprep.subr.mxu0 %v102
    %1156 = vmatpush1.msra.mxu0 %v101
    %1157 = vmatprep.subr.mxu0 %v106
    %1158 = vmatpush1.msra.mxu0 %v105
    %1159 = vmatprep.subr.mxu0 %v110
    %1160 = vmatpush1.msra.mxu0 %v109
    %1161 = vmatprep.subr.mxu0 %v114
    %1162 = vmatpush1.msra.mxu0 %v113
    %1163 = vmatprep.subr.mxu0 %v118
    %1164 = vmatpush1.msra.mxu0 %v117
    %1165 = vmatprep.subr.mxu0 %v122
    %1166 = vmatpush1.msra.mxu0 %v121
    %1167 = vmatprep.subr.mxu0 %v126
    %1168 = vmatpush1.msra.mxu0 %v125
    %1169 = vmatprep.subr.mxu0 %v130
    %1170 = vmatpush1.msra.mxu0 %v129
    %1171 = vmatprep.subr.mxu0 %v134
    %1172 = vmatpush1.msra.mxu0 %v133
    %1173 = vmatprep.subr.mxu0 %v138
    %1174 = vmatpush1.msra.mxu0 %v137
    %1175 = vmatprep.subr.mxu0 %v142
    %1176 = vmatpush1.msra.mxu0 %v141
    %1177 = vmatprep.subr.mxu0 %v146
    %1178 = vmatpush1.msra.mxu0 %v145
    %1179 = vmatprep.subr.mxu0 0.0
    %1180 = vmatpush1.msra.mxu0 0.0
    %1181 = vmatprep.subr.mxu0 0.0
    %1182 = vmatpush1.msra.mxu0 0.0
    %1183 = vmatprep.subr.mxu0 0.0
    %1184 = vmatpush1.msra.mxu0 0.0
    %1185 = vmatprep.subr.mxu0 0.0
    %1186 = vmatpush1.msra.mxu0 0.0
    %1187 = vmatprep.subr.mxu0 0.0
    %1188 = vmatpush1.msra.mxu0 0.0
    %1189 = vmatprep.subr.mxu0 0.0
    %1190 = vmatpush1.msra.mxu0 0.0
    %1191 = vmatprep.subr.mxu0 0.0
    %1192 = vmatpush1.msra.mxu0 0.0
    %1193 = vmatprep.subr.mxu0 0.0
    %1194 = vmatpush1.msra.mxu0 0.0
    %1195 = vmatprep.subr.mxu0 0.0
    %1196 = vmatpush1.msra.mxu0 0.0
    %1197 = vmatprep.subr.mxu0 0.0
    %1198 = vmatpush1.msra.mxu0 0.0
    %1199 = vmatprep.subr.mxu0 0.0
    %1200 = vmatpush1.msra.mxu0 0.0
    %1201 = vmatprep.subr.mxu0 0.0
    %1202 = vmatpush1.msra.mxu0 0.0
    %1203 = vmatprep.subr.mxu0 0.0
    %1204 = vmatpush1.msra.mxu0 0.0
    %1205 = vmatprep.subr.mxu0 0.0
    %1206 = vmatpush1.msra.mxu0 0.0
    %1207 = vmatprep.subr.mxu0 0.0
    %1208 = vmatpush1.msra.mxu0 0.0
    %1209 = vmatprep.subr.mxu0 0.0
    %1210 = vmatpush1.msra.mxu0 0.0
    %1211 = vmatprep.mubr.f32.mxu0 0.0
    %1212 = vmatmul.mubr.f32.gmra.mrb[0].mxu0 %v1061
    %v1213 = vpop.f32.mrb[0].mxu0
    %v1214 = vadd.f32 0.0, %v1213
    %v1215 = vpop.f32.mrb[0].mxu0
    %v1216 = vadd.f32 0.0, %v1215
    %1217 = vdwg.mxu0
    %v1218 = vadd.f32 %v1072, %v1143
    %v1219 = vadd.f32 %v1073, %v1145
    %v1220 = vadd.f32 %v1074, %v1214
    %v1221 = vadd.f32 %v1075, %v1216
    %v1222 = vxor.u32 %v1218, 2147483648
    %v1223 = vmul.f32 %v1222, 1.442695
    %v1224 = vpow.pop %v1223
    %v1225 = vadd.f32 %v1224, 1.0
    %v1226 = vrcp.pop %v1225
    %v1227 = vmul.f32 1.0, %v1226
    %v1228 = vxor.u32 %v1219, 2147483648
    %v1229 = vmul.f32 %v1228, 1.442695
    %v1230 = vpow.pop %v1229
    %v1231 = vadd.f32 %v1230, 1.0
    %v1232 = vrcp.pop %v1231
    %v1233 = vmul.f32 1.0, %v1232
    %v1234 = vtanh.pop %v1220
    %v1235 = vxor.u32 %v1221, 2147483648
    %v1236 = vmul.f32 %v1235, 1.442695
    %v1237 = vpow.pop %v1236
    %v1238 = vadd.f32 %v1237, 1.0
    %v1239 = vrcp.pop %v1238
    %v1240 = vmul.f32 1.0, %v1239
    %v1241 = vmul.f32 %v1233, %v1059
    %v1242 = vmul.f32 %v1227, %v1234
    %v1243 = vadd.f32 %v1241, %v1242
    %v1244 = vtanh.pop %v1243
    %v1245 = vmul.f32 %v1240, %v1244
    %s1246 = sadd.s32 %s149, 5
    %v1247 = vstv %s1246
    %vm1248 = vcmp.eq.s32.totalorder %v148, %v1247
    %v1249 = vsel %vm1248, 1, 0
    %1250 = vset.pattern.permute.xlu0 0
    %1251 = vperm.xlu0 %1250, %v1249
    %v1252 = vpop.permute.xlu0 %1251
    %vm1253 = vcmp.eq.s32.totalorder %v1252, 1
    %v1254 = vsel %vm1253, %v1245, %v1070
    %s1255 = scalar_lea.vmem [#allocation9], 192
    %v1256 = vld [vmem:[%s1255] sm:$0xff]
    %v1257 = vld [vmem:[%s1255 + $0x8] sm:$0xff]
    %v1258 = vld [vmem:[%s1255 + $0x10] sm:$0xff]
    %v1259 = vld [vmem:[%s1255 + $0x18] sm:$0xff]
    %1260 = vmatprep.subr.mxu0 %v84
    %1261 = vmatpush1.msra.mxu0 %v83
    %1262 = vmatprep.subr.mxu0 %v88
    %1263 = vmatpush1.msra.mxu0 %v87
    %1264 = vmatprep.subr.mxu0 %v92
    %1265 = vmatpush1.msra.mxu0 %v91
    %1266 = vmatprep.subr.mxu0 %v96
    %1267 = vmatpush1.msra.mxu0 %v95
    %1268 = vmatprep.subr.mxu0 %v100
    %1269 = vmatpush1.msra.mxu0 %v99
    %1270 = vmatprep.subr.mxu0 %v104
    %1271 = vmatpush1.msra.mxu0 %v103
    %1272 = vmatprep.subr.mxu0 %v108
    %1273 = vmatpush1.msra.mxu0 %v107
    %1274 = vmatprep.subr.mxu0 %v112
    %1275 = vmatpush1.msra.mxu0 %v111
    %1276 = vmatprep.subr.mxu0 %v116
    %1277 = vmatpush1.msra.mxu0 %v115
    %1278 = vmatprep.subr.mxu0 %v120
    %1279 = vmatpush1.msra.mxu0 %v119
    %1280 = vmatprep.subr.mxu0 %v124
    %1281 = vmatpush1.msra.mxu0 %v123
    %1282 = vmatprep.subr.mxu0 %v128
    %1283 = vmatpush1.msra.mxu0 %v127
    %1284 = vmatprep.subr.mxu0 %v132
    %1285 = vmatpush1.msra.mxu0 %v131
    %1286 = vmatprep.subr.mxu0 %v136
    %1287 = vmatpush1.msra.mxu0 %v135
    %1288 = vmatprep.subr.mxu0 %v140
    %1289 = vmatpush1.msra.mxu0 %v139
    %1290 = vmatprep.subr.mxu0 %v144
    %1291 = vmatpush1.msra.mxu0 %v143
    %1292 = vmatprep.subr.mxu0 0.0
    %1293 = vmatpush1.msra.mxu0 0.0
    %1294 = vmatprep.subr.mxu0 0.0
    %1295 = vmatpush1.msra.mxu0 0.0
    %1296 = vmatprep.subr.mxu0 0.0
    %1297 = vmatpush1.msra.mxu0 0.0
    %1298 = vmatprep.subr.mxu0 0.0
    %1299 = vmatpush1.msra.mxu0 0.0
    %1300 = vmatprep.subr.mxu0 0.0
    %1301 = vmatpush1.msra.mxu0 0.0
    %1302 = vmatprep.subr.mxu0 0.0
    %1303 = vmatpush1.msra.mxu0 0.0
    %1304 = vmatprep.subr.mxu0 0.0
    %1305 = vmatpush1.msra.mxu0 0.0
    %1306 = vmatprep.subr.mxu0 0.0
    %1307 = vmatpush1.msra.mxu0 0.0
    %1308 = vmatprep.subr.mxu0 0.0
    %1309 = vmatpush1.msra.mxu0 0.0
    %1310 = vmatprep.subr.mxu0 0.0
    %1311 = vmatpush1.msra.mxu0 0.0
    %1312 = vmatprep.subr.mxu0 0.0
    %1313 = vmatpush1.msra.mxu0 0.0
    %1314 = vmatprep.subr.mxu0 0.0
    %1315 = vmatpush1.msra.mxu0 0.0
    %1316 = vmatprep.subr.mxu0 0.0
    %1317 = vmatpush1.msra.mxu0 0.0
    %1318 = vmatprep.subr.mxu0 0.0
    %1319 = vmatpush1.msra.mxu0 0.0
    %1320 = vmatprep.subr.mxu0 0.0
    %1321 = vmatpush1.msra.mxu0 0.0
    %1322 = vmatprep.subr.mxu0 0.0
    %1323 = vmatpush1.msra.mxu0 0.0
    %1324 = vmatprep.mubr.f32.mxu0 0.0
    %1325 = vmatmul.mubr.f32.gmra.mrb[0].mxu0 %v1245
    %v1326 = vpop.f32.mrb[0].mxu0
    %v1327 = vadd.f32 0.0, %v1326
    %v1328 = vpop.f32.mrb[0].mxu0
    %v1329 = vadd.f32 0.0, %v1328
    %1330 = vdwg.mxu0
    %1331 = vmatprep.subr.mxu0 %v86
    %1332 = vmatpush1.msra.mxu0 %v85
    %1333 = vmatprep.subr.mxu0 %v90
    %1334 = vmatpush1.msra.mxu0 %v89
    %1335 = vmatprep.subr.mxu0 %v94
    %1336 = vmatpush1.msra.mxu0 %v93
    %1337 = vmatprep.subr.mxu0 %v98
    %1338 = vmatpush1.msra.mxu0 %v97
    %1339 = vmatprep.subr.mxu0 %v102
    %1340 = vmatpush1.msra.mxu0 %v101
    %1341 = vmatprep.subr.mxu0 %v106
    %1342 = vmatpush1.msra.mxu0 %v105
    %1343 = vmatprep.subr.mxu0 %v110
    %1344 = vmatpush1.msra.mxu0 %v109
    %1345 = vmatprep.subr.mxu0 %v114
    %1346 = vmatpush1.msra.mxu0 %v113
    %1347 = vmatprep.subr.mxu0 %v118
    %1348 = vmatpush1.msra.mxu0 %v117
    %1349 = vmatprep.subr.mxu0 %v122
    %1350 = vmatpush1.msra.mxu0 %v121
    %1351 = vmatprep.subr.mxu0 %v126
    %1352 = vmatpush1.msra.mxu0 %v125
    %1353 = vmatprep.subr.mxu0 %v130
    %1354 = vmatpush1.msra.mxu0 %v129
    %1355 = vmatprep.subr.mxu0 %v134
    %1356 = vmatpush1.msra.mxu0 %v133
    %1357 = vmatprep.subr.mxu0 %v138
    %1358 = vmatpush1.msra.mxu0 %v137
    %1359 = vmatprep.subr.mxu0 %v142
    %1360 = vmatpush1.msra.mxu0 %v141
    %1361 = vmatprep.subr.mxu0 %v146
    %1362 = vmatpush1.msra.mxu0 %v145
    %1363 = vmatprep.subr.mxu0 0.0
    %1364 = vmatpush1.msra.mxu0 0.0
    %1365 = vmatprep.subr.mxu0 0.0
    %1366 = vmatpush1.msra.mxu0 0.0
    %1367 = vmatprep.subr.mxu0 0.0
    %1368 = vmatpush1.msra.mxu0 0.0
    %1369 = vmatprep.subr.mxu0 0.0
    %1370 = vmatpush1.msra.mxu0 0.0
    %1371 = vmatprep.subr.mxu0 0.0
    %1372 = vmatpush1.msra.mxu0 0.0
    %1373 = vmatprep.subr.mxu0 0.0
    %1374 = vmatpush1.msra.mxu0 0.0
    %1375 = vmatprep.subr.mxu0 0.0
    %1376 = vmatpush1.msra.mxu0 0.0
    %1377 = vmatprep.subr.mxu0 0.0
    %1378 = vmatpush1.msra.mxu0 0.0
    %1379 = vmatprep.subr.mxu0 0.0
    %1380 = vmatpush1.msra.mxu0 0.0
    %1381 = vmatprep.subr.mxu0 0.0
    %1382 = vmatpush1.msra.mxu0 0.0
    %1383 = vmatprep.subr.mxu0 0.0
    %1384 = vmatpush1.msra.mxu0 0.0
    %1385 = vmatprep.subr.mxu0 0.0
    %1386 = vmatpush1.msra.mxu0 0.0
    %1387 = vmatprep.subr.mxu0 0.0
    %1388 = vmatpush1.msra.mxu0 0.0
    %1389 = vmatprep.subr.mxu0 0.0
    %1390 = vmatpush1.msra.mxu0 0.0
    %1391 = vmatprep.subr.mxu0 0.0
    %1392 = vmatpush1.msra.mxu0 0.0
    %1393 = vmatprep.subr.mxu0 0.0
    %1394 = vmatpush1.msra.mxu0 0.0
    %1395 = vmatprep.mubr.f32.mxu0 0.0
    %1396 = vmatmul.mubr.f32.gmra.mrb[0].mxu0 %v1245
    %v1397 = vpop.f32.mrb[0].mxu0
    %v1398 = vadd.f32 0.0, %v1397
    %v1399 = vpop.f32.mrb[0].mxu0
    %v1400 = vadd.f32 0.0, %v1399
    %1401 = vdwg.mxu0
    %v1402 = vadd.f32 %v1256, %v1327
    %v1403 = vadd.f32 %v1257, %v1329
    %v1404 = vadd.f32 %v1258, %v1398
    %v1405 = vadd.f32 %v1259, %v1400
    %v1406 = vxor.u32 %v1402, 2147483648
    %v1407 = vmul.f32 %v1406, 1.442695
    %v1408 = vpow.pop %v1407
    %v1409 = vadd.f32 %v1408, 1.0
    %v1410 = vrcp.pop %v1409
    %v1411 = vmul.f32 1.0, %v1410
    %v1412 = vxor.u32 %v1403, 2147483648
    %v1413 = vmul.f32 %v1412, 1.442695
    %v1414 = vpow.pop %v1413
    %v1415 = vadd.f32 %v1414, 1.0
    %v1416 = vrcp.pop %v1415
    %v1417 = vmul.f32 1.0, %v1416
    %v1418 = vtanh.pop %v1404
    %v1419 = vxor.u32 %v1405, 2147483648
    %v1420 = vmul.f32 %v1419, 1.442695
    %v1421 = vpow.pop %v1420
    %v1422 = vadd.f32 %v1421, 1.0
    %v1423 = vrcp.pop %v1422
    %v1424 = vmul.f32 1.0, %v1423
    %v1425 = vmul.f32 %v1417, %v1243
    %v1426 = vmul.f32 %v1411, %v1418
    %v1427 = vadd.f32 %v1425, %v1426
    %v1428 = vtanh.pop %v1427
    %v1429 = vmul.f32 %v1424, %v1428
    %s1430 = sadd.s32 %s149, 6
    %v1431 = vstv %s1430
    %vm1432 = vcmp.eq.s32.totalorder %v148, %v1431
    %v1433 = vsel %vm1432, 1, 0
    %1434 = vset.pattern.permute.xlu0 0
    %1435 = vperm.xlu0 %1434, %v1433
    %v1436 = vpop.permute.xlu0 %1435
    %vm1437 = vcmp.eq.s32.totalorder %v1436, 1
    %v1438 = vsel %vm1437, %v1429, %v1254
    %s1439 = scalar_lea.vmem [#allocation9], 224
    %v1440 = vld [vmem:[%s1439] sm:$0xff]
    %v1441 = vld [vmem:[%s1439 + $0x8] sm:$0xff]
    %v1442 = vld [vmem:[%s1439 + $0x10] sm:$0xff]
    %v1443 = vld [vmem:[%s1439 + $0x18] sm:$0xff]
    %1444 = vmatprep.subr.mxu0 %v84
    %1445 = vmatpush1.msra.mxu0 %v83
    %1446 = vmatprep.subr.mxu0 %v88
    %1447 = vmatpush1.msra.mxu0 %v87
    %1448 = vmatprep.subr.mxu0 %v92
    %1449 = vmatpush1.msra.mxu0 %v91
    %1450 = vmatprep.subr.mxu0 %v96
    %1451 = vmatpush1.msra.mxu0 %v95
    %1452 = vmatprep.subr.mxu0 %v100
    %1453 = vmatpush1.msra.mxu0 %v99
    %1454 = vmatprep.subr.mxu0 %v104
    %1455 = vmatpush1.msra.mxu0 %v103
    %1456 = vmatprep.subr.mxu0 %v108
    %1457 = vmatpush1.msra.mxu0 %v107
    %1458 = vmatprep.subr.mxu0 %v112
    %1459 = vmatpush1.msra.mxu0 %v111
    %1460 = vmatprep.subr.mxu0 %v116
    %1461 = vmatpush1.msra.mxu0 %v115
    %1462 = vmatprep.subr.mxu0 %v120
    %1463 = vmatpush1.msra.mxu0 %v119
    %1464 = vmatprep.subr.mxu0 %v124
    %1465 = vmatpush1.msra.mxu0 %v123
    %1466 = vmatprep.subr.mxu0 %v128
    %1467 = vmatpush1.msra.mxu0 %v127
    %1468 = vmatprep.subr.mxu0 %v132
    %1469 = vmatpush1.msra.mxu0 %v131
    %1470 = vmatprep.subr.mxu0 %v136
    %1471 = vmatpush1.msra.mxu0 %v135
    %1472 = vmatprep.subr.mxu0 %v140
    %1473 = vmatpush1.msra.mxu0 %v139
    %1474 = vmatprep.subr.mxu0 %v144
    %1475 = vmatpush1.msra.mxu0 %v143
    %1476 = vmatprep.subr.mxu0 0.0
    %1477 = vmatpush1.msra.mxu0 0.0
    %1478 = vmatprep.subr.mxu0 0.0
    %1479 = vmatpush1.msra.mxu0 0.0
    %1480 = vmatprep.subr.mxu0 0.0
    %1481 = vmatpush1.msra.mxu0 0.0
    %1482 = vmatprep.subr.mxu0 0.0
    %1483 = vmatpush1.msra.mxu0 0.0
    %1484 = vmatprep.subr.mxu0 0.0
    %1485 = vmatpush1.msra.mxu0 0.0
    %1486 = vmatprep.subr.mxu0 0.0
    %1487 = vmatpush1.msra.mxu0 0.0
    %1488 = vmatprep.subr.mxu0 0.0
    %1489 = vmatpush1.msra.mxu0 0.0
    %1490 = vmatprep.subr.mxu0 0.0
    %1491 = vmatpush1.msra.mxu0 0.0
    %1492 = vmatprep.subr.mxu0 0.0
    %1493 = vmatpush1.msra.mxu0 0.0
    %1494 = vmatprep.subr.mxu0 0.0
    %1495 = vmatpush1.msra.mxu0 0.0
    %1496 = vmatprep.subr.mxu0 0.0
    %1497 = vmatpush1.msra.mxu0 0.0
    %1498 = vmatprep.subr.mxu0 0.0
    %1499 = vmatpush1.msra.mxu0 0.0
    %1500 = vmatprep.subr.mxu0 0.0
    %1501 = vmatpush1.msra.mxu0 0.0
    %1502 = vmatprep.subr.mxu0 0.0
    %1503 = vmatpush1.msra.mxu0 0.0
    %1504 = vmatprep.subr.mxu0 0.0
    %1505 = vmatpush1.msra.mxu0 0.0
    %1506 = vmatprep.subr.mxu0 0.0
    %1507 = vmatpush1.msra.mxu0 0.0
    %1508 = vmatprep.mubr.f32.mxu0 0.0
    %1509 = vmatmul.mubr.f32.gmra.mrb[0].mxu0 %v1429
    %v1510 = vpop.f32.mrb[0].mxu0
    %v1511 = vadd.f32 0.0, %v1510
    %v1512 = vpop.f32.mrb[0].mxu0
    %v1513 = vadd.f32 0.0, %v1512
    %1514 = vdwg.mxu0
    %1515 = vmatprep.subr.mxu0 %v86
    %1516 = vmatpush1.msra.mxu0 %v85
    %1517 = vmatprep.subr.mxu0 %v90
    %1518 = vmatpush1.msra.mxu0 %v89
    %1519 = vmatprep.subr.mxu0 %v94
    %1520 = vmatpush1.msra.mxu0 %v93
    %1521 = vmatprep.subr.mxu0 %v98
    %1522 = vmatpush1.msra.mxu0 %v97
    %1523 = vmatprep.subr.mxu0 %v102
    %1524 = vmatpush1.msra.mxu0 %v101
    %1525 = vmatprep.subr.mxu0 %v106
    %1526 = vmatpush1.msra.mxu0 %v105
    %1527 = vmatprep.subr.mxu0 %v110
    %1528 = vmatpush1.msra.mxu0 %v109
    %1529 = vmatprep.subr.mxu0 %v114
    %1530 = vmatpush1.msra.mxu0 %v113
    %1531 = vmatprep.subr.mxu0 %v118
    %1532 = vmatpush1.msra.mxu0 %v117
    %1533 = vmatprep.subr.mxu0 %v122
    %1534 = vmatpush1.msra.mxu0 %v121
    %1535 = vmatprep.subr.mxu0 %v126
    %1536 = vmatpush1.msra.mxu0 %v125
    %1537 = vmatprep.subr.mxu0 %v130
    %1538 = vmatpush1.msra.mxu0 %v129
    %1539 = vmatprep.subr.mxu0 %v134
    %1540 = vmatpush1.msra.mxu0 %v133
    %1541 = vmatprep.subr.mxu0 %v138
    %1542 = vmatpush1.msra.mxu0 %v137
    %1543 = vmatprep.subr.mxu0 %v142
    %1544 = vmatpush1.msra.mxu0 %v141
    %1545 = vmatprep.subr.mxu0 %v146
    %1546 = vmatpush1.msra.mxu0 %v145
    %1547 = vmatprep.subr.mxu0 0.0
    %1548 = vmatpush1.msra.mxu0 0.0
    %1549 = vmatprep.subr.mxu0 0.0
    %1550 = vmatpush1.msra.mxu0 0.0
    %1551 = vmatprep.subr.mxu0 0.0
    %1552 = vmatpush1.msra.mxu0 0.0
    %1553 = vmatprep.subr.mxu0 0.0
    %1554 = vmatpush1.msra.mxu0 0.0
    %1555 = vmatprep.subr.mxu0 0.0
    %1556 = vmatpush1.msra.mxu0 0.0
    %1557 = vmatprep.subr.mxu0 0.0
    %1558 = vmatpush1.msra.mxu0 0.0
    %1559 = vmatprep.subr.mxu0 0.0
    %1560 = vmatpush1.msra.mxu0 0.0
    %1561 = vmatprep.subr.mxu0 0.0
    %1562 = vmatpush1.msra.mxu0 0.0
    %1563 = vmatprep.subr.mxu0 0.0
    %1564 = vmatpush1.msra.mxu0 0.0
    %1565 = vmatprep.subr.mxu0 0.0
    %1566 = vmatpush1.msra.mxu0 0.0
    %1567 = vmatprep.subr.mxu0 0.0
    %1568 = vmatpush1.msra.mxu0 0.0
    %1569 = vmatprep.subr.mxu0 0.0
    %1570 = vmatpush1.msra.mxu0 0.0
    %1571 = vmatprep.subr.mxu0 0.0
    %1572 = vmatpush1.msra.mxu0 0.0
    %1573 = vmatprep.subr.mxu0 0.0
    %1574 = vmatpush1.msra.mxu0 0.0
    %1575 = vmatprep.subr.mxu0 0.0
    %1576 = vmatpush1.msra.mxu0 0.0
    %1577 = vmatprep.subr.mxu0 0.0
    %1578 = vmatpush1.msra.mxu0 0.0
    %1579 = vmatprep.mubr.f32.mxu0 0.0
    %1580 = vmatmul.mubr.f32.gmra.mrb[0].mxu0 %v1429
    %v1581 = vpop.f32.mrb[0].mxu0
    %v1582 = vadd.f32 0.0, %v1581
    %v1583 = vpop.f32.mrb[0].mxu0
    %v1584 = vadd.f32 0.0, %v1583
    %1585 = vdwg.mxu0
    %v1586 = vadd.f32 %v1440, %v1511
    %v1587 = vadd.f32 %v1441, %v1513
    %v1588 = vadd.f32 %v1442, %v1582
    %v1589 = vadd.f32 %v1443, %v1584
    %v1590 = vxor.u32 %v1586, 2147483648
    %v1591 = vmul.f32 %v1590, 1.442695
    %v1592 = vpow.pop %v1591
    %v1593 = vadd.f32 %v1592, 1.0
    %v1594 = vrcp.pop %v1593
    %v1595 = vmul.f32 1.0, %v1594
    %v1596 = vxor.u32 %v1587, 2147483648
    %v1597 = vmul.f32 %v1596, 1.442695
    %v1598 = vpow.pop %v1597
    %v1599 = vadd.f32 %v1598, 1.0
    %v1600 = vrcp.pop %v1599
    %v1601 = vmul.f32 1.0, %v1600
    %v1602 = vtanh.pop %v1588
    %v1603 = vxor.u32 %v1589, 2147483648
    %v1604 = vmul.f32 %v1603, 1.442695
    %v1605 = vpow.pop %v1604
    %v1606 = vadd.f32 %v1605, 1.0
    %v1607 = vrcp.pop %v1606
    %v1608 = vmul.f32 1.0, %v1607
    %v1609 = vmul.f32 %v1601, %v1427
    %v1610 = vmul.f32 %v1595, %v1602
    %v1611 = vadd.f32 %v1609, %v1610
    %v1612 = vtanh.pop %v1611
    %v1613 = vmul.f32 %v1608, %v1612
    %s1614 = sadd.s32 %s149, 7
    %v1615 = vstv %s1614
    %vm1616 = vcmp.eq.s32.totalorder %v148, %v1615
    %v1617 = vsel %vm1616, 1, 0
    %1618 = vset.pattern.permute.xlu0 0
    %1619 = vperm.xlu0 %1618, %v1617
    %v1620 = vpop.permute.xlu0 %1619
    %vm1621 = vcmp.eq.s32.totalorder %v1620, 1
    %v1622 = vsel %vm1621, %v1613, %v1438
    %1623 = vst [vmem:[#allocation2] sm:$0xff] %v1613
    %1624 = vst [vmem:[#allocation3] sm:$0xff] %v1611
    %1625 = vst [vmem:[#allocation4] sm:$0xff] %v1622
    // Predicated region
    $region42: #{rnn_binary_classifier_forward.1} parent=1 // pred_check
      %p1626 = pneg %p76
    $region43: #{rnn_binary_classifier_forward.1} parent=1 // pred_check_branch
      %1628 = sbr.rel (%p1626) target = $region45
    $region44: #{rnn_binary_classifier_forward.1} parent=1 // pred_region
      %v1629 = vld [vmem:[#allocation12] sm:$0xff]
      %v1630 = vld [vmem:[#allocation12 + $0x8] sm:$0xff]
      %v1631 = vld [vmem:[#allocation12 + $0x10] sm:$0xff]
      %v1632 = vld [vmem:[#allocation12 + $0x18] sm:$0xff]
      %v1633 = vld [vmem:[#allocation12 + $0x20] sm:$0xff]
      %v1634 = vld [vmem:[#allocation12 + $0x28] sm:$0xff]
      %v1635 = vld [vmem:[#allocation12 + $0x30] sm:$0xff]
      %v1636 = vld [vmem:[#allocation12 + $0x38] sm:$0xff]
      %v1637 = vld [vmem:[#allocation12 + $0x40] sm:$0xff]
      %v1638 = vld [vmem:[#allocation12 + $0x48] sm:$0xff]
      %v1639 = vld [vmem:[#allocation12 + $0x50] sm:$0xff]
      %v1640 = vld [vmem:[#allocation12 + $0x58] sm:$0xff]
      %v1641 = vld [vmem:[#allocation12 + $0x60] sm:$0xff]
      %v1642 = vld [vmem:[#allocation12 + $0x68] sm:$0xff]
      %v1643 = vld [vmem:[#allocation12 + $0x70] sm:$0xff]
      %v1644 = vld [vmem:[#allocation12 + $0x78] sm:$0xff]
      %v1645 = vld [vmem:[#allocation5] sm:$0x1]
      %v1647 = vlaneseq
      %v1648 = vshrl.u32 %v1647, 7
      %v1649 = vsub.s32 0, %v1648
      %v1650 = vrot.slane %v1645, %v1649
      %1652 = vmatprep.subr.mxu0 0.0
      %1653 = vmatpush1.msra.mxu0 %v1629
      %1654 = vmatprep.subr.mxu0 0.0
      %1655 = vmatpush1.msra.mxu0 %v1630
      %1656 = vmatprep.subr.mxu0 0.0
      %1657 = vmatpush1.msra.mxu0 %v1631
      %1658 = vmatprep.subr.mxu0 0.0
      %1659 = vmatpush1.msra.mxu0 %v1632
      %1660 = vmatprep.subr.mxu0 0.0
      %1661 = vmatpush1.msra.mxu0 %v1633
      %1662 = vmatprep.subr.mxu0 0.0
      %1663 = vmatpush1.msra.mxu0 %v1634
      %1664 = vmatprep.subr.mxu0 0.0
      %1665 = vmatpush1.msra.mxu0 %v1635
      %1666 = vmatprep.subr.mxu0 0.0
      %1667 = vmatpush1.msra.mxu0 %v1636
      %1668 = vmatprep.subr.mxu0 0.0
      %1669 = vmatpush1.msra.mxu0 %v1637
      %1670 = vmatprep.subr.mxu0 0.0
      %1671 = vmatpush1.msra.mxu0 %v1638
      %1672 = vmatprep.subr.mxu0 0.0
      %1673 = vmatpush1.msra.mxu0 %v1639
      %1674 = vmatprep.subr.mxu0 0.0
      %1675 = vmatpush1.msra.mxu0 %v1640
      %1676 = vmatprep.subr.mxu0 0.0
      %1677 = vmatpush1.msra.mxu0 %v1641
      %1678 = vmatprep.subr.mxu0 0.0
      %1679 = vmatpush1.msra.mxu0 %v1642
      %1680 = vmatprep.subr.mxu0 0.0
      %1681 = vmatpush1.msra.mxu0 %v1643
      %1682 = vmatprep.subr.mxu0 0.0
      %1683 = vmatpush1.msra.mxu0 %v1644
      %1684 = vmatprep.subr.mxu0 0.0
      %1685 = vmatpush1.msra.mxu0 0.0
      %1686 = vmatprep.subr.mxu0 0.0
      %1687 = vmatpush1.msra.mxu0 0.0
      %1688 = vmatprep.subr.mxu0 0.0
      %1689 = vmatpush1.msra.mxu0 0.0
      %1690 = vmatprep.subr.mxu0 0.0
      %1691 = vmatpush1.msra.mxu0 0.0
      %1692 = vmatprep.subr.mxu0 0.0
      %1693 = vmatpush1.msra.mxu0 0.0
      %1694 = vmatprep.subr.mxu0 0.0
      %1695 = vmatpush1.msra.mxu0 0.0
      %1696 = vmatprep.subr.mxu0 0.0
      %1697 = vmatpush1.msra.mxu0 0.0
      %1698 = vmatprep.subr.mxu0 0.0
      %1699 = vmatpush1.msra.mxu0 0.0
      %1700 = vmatprep.subr.mxu0 0.0
      %1701 = vmatpush1.msra.mxu0 0.0
      %1702 = vmatprep.subr.mxu0 0.0
      %1703 = vmatpush1.msra.mxu0 0.0
      %1704 = vmatprep.subr.mxu0 0.0
      %1705 = vmatpush1.msra.mxu0 0.0
      %1706 = vmatprep.subr.mxu0 0.0
      %1707 = vmatpush1.msra.mxu0 0.0
      %1708 = vmatprep.subr.mxu0 0.0
      %1709 = vmatpush1.msra.mxu0 0.0
      %1710 = vmatprep.subr.mxu0 0.0
      %1711 = vmatpush1.msra.mxu0 0.0
      %1712 = vmatprep.subr.mxu0 0.0
      %1713 = vmatpush1.msra.mxu0 0.0
      %1714 = vmatprep.subr.mxu0 0.0
      %1715 = vmatpush1.msra.mxu0 0.0
      %1716 = vmatprep.mubr.f32.mxu0 0.0
      %1717 = vmatmul.mubr.f32.gmra.mrb[0].mxu0 %v1622
      %v1718 = vpop.f32.mrb[0].mxu0
      %v1719 = vadd.f32 %v1650, %v1718
      %v1720 = vpop.f32.mrb[0].mxu0
      %1721 = vdwg.mxu0
      %v1722 = vxor.u32 %v1719, 2147483648
      %v1723 = vmul.f32 %v1722, 1.442695
      %v1724 = vpow.pop %v1723
      %v1725 = vadd.f32 %v1724, 1.0
      %v1726 = vrcp.pop %v1725
      %v1727 = vmul.f32 1.0, %v1726
      %v1728 = vlaneseq
      %v1729 = vand.u32 %v1728, 127
      %vm1730 = vcmp.eq.s32.totalorder %v1729, 1
      %v1731 = vsub.f32 1.0, %v1727
      %1733 = vset.pattern.permute.xlu0 0
      %1734 = vperm.xlu0 %1733, %v1727
      %v1735 = vpop.permute.xlu0 %1734
      %1738 = vset.pattern.permute.xlu0 0
      %1739 = vperm.xlu0 %1738, %v1731
      %v1740 = vpop.permute.xlu0 %1739
      %v1742 = vsel %vm1730, %v1735, %v1740
      %vm1743 = vcmask 15360
      %1744 = vst.msk [vmem:[#allocation14] sm:$0xff] %vm1743, %v1742
    $region45: #{rnn_binary_classifier_forward.1} parent=1 // pred_fallthru
      _
    // Predicated region
    $region46: #{rnn_binary_classifier_forward.1} parent=1 // pred_check
      _
    $region47: #{rnn_binary_classifier_forward.1} parent=1 // pred_check_branch
      %1746 = sbr.rel (0) target = $region49
    $region48: #{rnn_binary_classifier_forward.1} parent=1 // pred_region
      %s1748 = ssub.s32 128, 128
      %1749 = vsyncadd [#allocation8], %s1748
      %s1751 = sshll.u32 [#allocation14], 4
      %s1752 = int_to_ptr.vmem [resolvable:$true] %s1751
      %1754 = dma.vmem_to_hbm [thread:$0]  %s1752, 128, %s5, [#allocation8]
    $region49: #{rnn_binary_classifier_forward.1} parent=1 // pred_fallthru
      _
    // Predicated region
    $region50: #{rnn_binary_classifier_forward.1} parent=1 // pred_check
      _
    $region51: #{rnn_binary_classifier_forward.1} parent=1 // pred_check_branch
      %1756 = sbr.rel (0) target = $region53
    $region52: #{rnn_binary_classifier_forward.1} parent=1 // pred_region
      %1757 = dma.done [#allocation8], 128
    $region53: #{rnn_binary_classifier_forward.1} parent=1 // pred_fallthru
      _
    %1758 = vsyncpa [#allocation7], 1
    %1759 = vsyncpa [#allocation10], 1
    %1760 = vsyncpa [#allocation13], 1
    %1761 = vsyncpa [#allocation8], 1

</llo_original>
